<compile_context>
chip_gen: v7x
topology: tpu7x:2x2x1
jax: 0.10.0
libtpu: 0.0.40
codegen_flags: <defaults>
</compile_context>

<pallas_src>
import functools

import jax
import jax.numpy as jnp
from jax.experimental import pallas as pl
from jax.experimental.pallas import tpu as pltpu


def _round_up(x, m):
    return ((x + m - 1) // m) * m


def _preferred_compute_dtype():
    """bf16 activations/transcendentals on v6e/v7x (bf16 VPU/EUP/MXU); f32
    elsewhere (v5e has no bf16 VPU/EUP, so bf16 would only add converts)."""
    try:
        kind = jax.devices()[0].device_kind.lower()
    except Exception:
        return jnp.dtype(jnp.float32)
    if any(tag in kind for tag in ("v6", "v7", "7x")):
        return jnp.dtype(jnp.bfloat16)
    return jnp.dtype(jnp.float32)


def policy_kernel(x_ref,
                  w1_ref, b1_ref,
                  w2_ref, b2_ref,
                  w3_ref, b3_ref,
                  w4_ref, b4_ref,
                  o_ref, *, compute_dtype):
    f32 = jnp.float32
    # f32 path: force accurate multi-pass MXU emulation (MXU has big slack —
    # the kernel is EUP-bound). bf16 path: native single-pass bf16 MXU.
    prec = jax.lax.Precision.HIGHEST if compute_dtype == jnp.dtype(f32) else None

    x = x_ref[...].astype(compute_dtype)                      # (TM, 8), rows = batch

    # Layer 1 doubles as the (batch, feat) -> lane-dense (feat, batch) relayout:
    # contract W1's and x's feature axes directly on the MXU (q @ k.T pattern),
    # so no wrapper transpose and no in-kernel XLU transpose is needed.
    h = jax.lax.dot_general(w1_ref[...], x, (((1,), (1,)), ((), ())),
                            precision=prec, preferred_element_type=f32)
    h = jnp.tanh((h + b1_ref[...]).astype(compute_dtype))     # (16, TM)

    h = jnp.dot(w2_ref[...], h, precision=prec, preferred_element_type=f32)
    h = jnp.tanh((h + b2_ref[...]).astype(compute_dtype))     # (16, TM)

    h = jnp.dot(w3_ref[...], h, precision=prec, preferred_element_type=f32)
    h = jnp.tanh((h + b3_ref[...]).astype(compute_dtype))     # (8, TM)

    logits = jnp.dot(w4_ref[...], h, precision=prec, preferred_element_type=f32)
    logits = logits + b4_ref[...]                             # (4, TM) f32

    # Numerically-stable softmax over the 4 logit rows. The manual 4-way
    # max/sum is pure elementwise work on lane-dense vregs (VALU filler).
    m = jnp.maximum(jnp.maximum(logits[0:1, :], logits[1:2, :]),
                    jnp.maximum(logits[2:3, :], logits[3:4, :]))          # (1, TM)
    e = jnp.exp((logits - m).astype(compute_dtype)).astype(f32)           # (4, TM)
    s = e[0:1, :] + e[1:2, :] + e[2:3, :] + e[3:4, :]                     # (1, TM)
    # Exact normalization: on TPU the f32 divide lowers to EUP vrcp + Newton
    # refinement, so rows sum to 1 to f32 accuracy (fixes the previous failure).
    o_ref[...] = (e * (1.0 / s)).astype(o_ref.dtype)


@functools.partial(jax.jit, static_argnums=(2, 3))
def _policy_forward(state, params, tm, compute_dtype):
    B, obs = state.shape
    assert obs == 8, "PolicyGradientNetwork expects 8-dim observations"
    tm = _round_up(max(int(tm), 128), 128)

    if B <= 1024:
        # Single block equal to the full arrays: no boundary masking at all.
        TM = B
    else:
        # Large lane tiles amortize the ~0.35us per-grid-step overhead; cap so
        # the 1-D batch grid keeps >= ~8 steps for v7x's two TensorCores.
        TM = min(tm, _round_up(pl.cdiv(B, 8), 128))
    grid = (pl.cdiv(B, TM),)

    cd = compute_dtype
    w1 = params["w1"].astype(cd)
    w2 = params["w2"].astype(cd)
    w3 = params["w3"].astype(cd)
    w4 = params["w4"].astype(cd)
    b1, b2, b3, b4 = params["b1"], params["b2"], params["b3"], params["b4"]

    in_specs = [
        pl.BlockSpec((TM, 8), lambda i: (i, 0)),        # x tile walks the batch rows
        pl.BlockSpec((16, 8), lambda i: (0, 0)),        # weights/biases: VMEM-resident
        pl.BlockSpec((16, 1), lambda i: (0, 0)),
        pl.BlockSpec((16, 16), lambda i: (0, 0)),
        pl.BlockSpec((16, 1), lambda i: (0, 0)),
        pl.BlockSpec((8, 16), lambda i: (0, 0)),
        pl.BlockSpec((8, 1), lambda i: (0, 0)),
        pl.BlockSpec((4, 8), lambda i: (0, 0)),
        pl.BlockSpec((4, 1), lambda i: (0, 0)),
    ]
    out_specs = pl.BlockSpec((4, TM), lambda i: (0, i))  # lane-dense output slab

    out_t = pl.pallas_call(
        functools.partial(policy_kernel, compute_dtype=cd),
        out_shape=jax.ShapeDtypeStruct((4, B), jnp.float32),
        grid=grid,
        in_specs=in_specs,
        out_specs=out_specs,
        compiler_params=pltpu.CompilerParams(
            dimension_semantics=("parallel",),
            # Explicit guard (v5e's default scoped VMEM is only 16 MiB).
            # Plenty for TM=8192 f32; raise if sweeping tm toward 32k.
            vmem_limit_bytes=32 * 1024 * 1024),
    )(state, w1, b1, w2, b2, w3, b3, w4, b4)

    return out_t.T                                       # (B, 4)


def policy_forward(state, params, tm=8192, compute_dtype=None):
    """state: (B, 8) f32.  params: PyTorch-layout W (out,in), biases (out,1)."""
    if compute_dtype is None:
        compute_dtype = _preferred_compute_dtype()
    return _policy_forward(state, params, int(tm), jnp.dtype(compute_dtype))


def init_params(key):
    """PyTorch nn.Linear default init (U(-1/sqrt(fan_in), +)); W stored as
    (out_features, in_features), biases as (out_features, 1) column vectors."""
    dims = [(8, 16), (16, 16), (16, 8), (8, 4)]          # (in, out) per layer
    params = {}
    keys = jax.random.split(key, 2 * len(dims))
    for idx, (fan_in, fan_out) in enumerate(dims):
        bound = 1.0 / (fan_in ** 0.5)
        w = jax.random.uniform(keys[2 * idx], (fan_out, fan_in),
                               minval=-bound, maxval=bound, dtype=jnp.float32)
        b = jax.random.uniform(keys[2 * idx + 1], (fan_out, 1),
                               minval=-bound, maxval=bound, dtype=jnp.float32)
        params[f"w{idx + 1}"] = w
        params[f"b{idx + 1}"] = b
    return params


def reference_forward(state, p):
    # HIGHEST precision so the reference itself is f32-accurate on TPU.
    hp = jax.lax.Precision.HIGHEST
    h = jnp.tanh(jnp.dot(state, p["w1"].T, precision=hp) + p["b1"].T)
    h = jnp.tanh(jnp.dot(h, p["w2"].T, precision=hp) + p["b2"].T)
    h = jnp.tanh(jnp.dot(h, p["w3"].T, precision=hp) + p["b3"].T)
    logits = jnp.dot(h, p["w4"].T, precision=hp) + p["b4"].T
    return jax.nn.softmax(logits, axis=-1)


if __name__ == "__main__":
    key = jax.random.PRNGKey(0)
    k_params, k_small, k_big = jax.random.split(key, 3)
    params = init_params(k_params)

    # Small shape consistent with the module (batch=8, obs_dim=8), plus a
    # larger batch that exercises the tiled multi-grid-step path (2048 = 8*256).
    for batch, k_state in ((8, k_small), (2048, k_big)):
        state = jax.random.normal(k_state, (batch, 8), dtype=jnp.float32)
        ref = reference_forward(state, params)

        # f32 path: tight check of the kernel structure / tiling / softmax.
        out = jax.block_until_ready(
            policy_forward(state, params, compute_dtype=jnp.float32))
        assert out.shape == (batch, 4)
        assert bool(jnp.allclose(jnp.sum(out, axis=-1), 1.0, atol=1e-3))
        assert bool(jnp.allclose(out, ref, atol=5e-3, rtol=5e-3))

        # Auto path: bf16 activations/transcendentals on v6e/v7x, f32 elsewhere
        # (reduced-precision mode -> looser, but still meaningful, tolerance).
        out_auto = jax.block_until_ready(policy_forward(state, params))
        assert out_auto.shape == (batch, 4)
        assert bool(jnp.allclose(jnp.sum(out_auto, axis=-1), 1.0, atol=1e-3))
        assert bool(jnp.allclose(out_auto, ref, atol=5e-2, rtol=5e-2))

    print("KERNEL_OK")
</pallas_src>

<mosaic_0001>
module attributes {stable_mosaic.version = 11 : i64} {
  func.func @policy_kernel(%arg0: i32, %arg1: memref<8x8xf32, #tpu.memory_space<vmem>>, %arg2: memref<16x8xf32, #tpu.memory_space<vmem>>, %arg3: memref<16x1xf32, #tpu.memory_space<vmem>>, %arg4: memref<16x16xf32, #tpu.memory_space<vmem>>, %arg5: memref<16x1xf32, #tpu.memory_space<vmem>>, %arg6: memref<8x16xf32, #tpu.memory_space<vmem>>, %arg7: memref<8x1xf32, #tpu.memory_space<vmem>>, %arg8: memref<4x8xf32, #tpu.memory_space<vmem>>, %arg9: memref<4x1xf32, #tpu.memory_space<vmem>>, %arg10: memref<4x8xf32, #tpu.memory_space<vmem>>) attributes {dimension_semantics = [#tpu.dimension_semantics<parallel>], iteration_bounds = array<i64: 1>, scalar_prefetch = 0 : i64, scratch_operands = 0 : i64, tpu.core_type = #tpu.core_type<tc>, window_params = [{transform_indices = @transform_0, window_bounds = array<i64: 8, 8>}, {pipeline_mode = #tpu.pipeline_mode<synchronous>, transform_indices = @transform_1, window_bounds = array<i64: 16, 8>}, {pipeline_mode = #tpu.pipeline_mode<synchronous>, transform_indices = @transform_2, window_bounds = array<i64: 16, 1>}, {pipeline_mode = #tpu.pipeline_mode<synchronous>, transform_indices = @transform_3, window_bounds = array<i64: 16, 16>}, {pipeline_mode = #tpu.pipeline_mode<synchronous>, transform_indices = @transform_4, window_bounds = array<i64: 16, 1>}, {pipeline_mode = #tpu.pipeline_mode<synchronous>, transform_indices = @transform_5, window_bounds = array<i64: 8, 16>}, {pipeline_mode = #tpu.pipeline_mode<synchronous>, transform_indices = @transform_6, window_bounds = array<i64: 8, 1>}, {pipeline_mode = #tpu.pipeline_mode<synchronous>, transform_indices = @transform_7, window_bounds = array<i64: 4, 8>}, {pipeline_mode = #tpu.pipeline_mode<synchronous>, transform_indices = @transform_8, window_bounds = array<i64: 4, 1>}, {transform_indices = @transform_9, window_bounds = array<i64: 4, 8>}]} {
    %c0 = arith.constant 0 : index
    %c0_0 = arith.constant 0 : index
    %0 = vector.load %arg1[%c0, %c0_0] : memref<8x8xf32, #tpu.memory_space<vmem>>, vector<8x8xf32>
    %c0_1 = arith.constant 0 : index
    %c0_2 = arith.constant 0 : index
    %1 = vector.load %arg2[%c0_1, %c0_2] : memref<16x8xf32, #tpu.memory_space<vmem>>, vector<16x8xf32>
    %cst = arith.constant dense<0.000000e+00> : vector<16x8xf32>
    %2 = tpu.matmul %1, %0, %cst {dimension_numbers = #tpu.dot_dimension_numbers<[1], [1], [0], [0], [0, 0, 1, 0], [], []>, precision = #tpu.contract_precision<fp32>} : vector<16x8xf32>, vector<8x8xf32>, vector<16x8xf32> -> vector<16x8xf32>
    %c0_3 = arith.constant 0 : index
    %c0_4 = arith.constant 0 : index
    %3 = vector.load %arg3[%c0_3, %c0_4] : memref<16x1xf32, #tpu.memory_space<vmem>>, vector<16x1xf32>
    %4 = vector.broadcast %3 : vector<16x1xf32> to vector<16x8xf32>
    %5 = arith.addf %2, %4 : vector<16x8xf32>
    %6 = math.tanh %5 : vector<16x8xf32>
    %c0_5 = arith.constant 0 : index
    %c0_6 = arith.constant 0 : index
    %7 = vector.load %arg4[%c0_5, %c0_6] : memref<16x16xf32, #tpu.memory_space<vmem>>, vector<16x16xf32>
    %cst_7 = arith.constant dense<0.000000e+00> : vector<16x8xf32>
    %8 = tpu.matmul %7, %6, %cst_7 {dimension_numbers = #tpu.dot_dimension_numbers<[1], [0], [0], [1], [0, 0, 1, 1], [], []>, precision = #tpu.contract_precision<fp32>} : vector<16x16xf32>, vector<16x8xf32>, vector<16x8xf32> -> vector<16x8xf32>
    %c0_8 = arith.constant 0 : index
    %c0_9 = arith.constant 0 : index
    %9 = vector.load %arg5[%c0_8, %c0_9] : memref<16x1xf32, #tpu.memory_space<vmem>>, vector<16x1xf32>
    %10 = vector.broadcast %9 : vector<16x1xf32> to vector<16x8xf32>
    %11 = arith.addf %8, %10 : vector<16x8xf32>
    %12 = math.tanh %11 : vector<16x8xf32>
    %c0_10 = arith.constant 0 : index
    %c0_11 = arith.constant 0 : index
    %13 = vector.load %arg6[%c0_10, %c0_11] : memref<8x16xf32, #tpu.memory_space<vmem>>, vector<8x16xf32>
    %cst_12 = arith.constant dense<0.000000e+00> : vector<8x8xf32>
    %14 = tpu.matmul %13, %12, %cst_12 {dimension_numbers = #tpu.dot_dimension_numbers<[1], [0], [0], [1], [0, 0, 1, 1], [], []>, precision = #tpu.contract_precision<fp32>} : vector<8x16xf32>, vector<16x8xf32>, vector<8x8xf32> -> vector<8x8xf32>
    %c0_13 = arith.constant 0 : index
    %c0_14 = arith.constant 0 : index
    %15 = vector.load %arg7[%c0_13, %c0_14] : memref<8x1xf32, #tpu.memory_space<vmem>>, vector<8x1xf32>
    %16 = vector.broadcast %15 : vector<8x1xf32> to vector<8x8xf32>
    %17 = arith.addf %14, %16 : vector<8x8xf32>
    %18 = math.tanh %17 : vector<8x8xf32>
    %c0_15 = arith.constant 0 : index
    %c0_16 = arith.constant 0 : index
    %19 = vector.load %arg8[%c0_15, %c0_16] : memref<4x8xf32, #tpu.memory_space<vmem>>, vector<4x8xf32>
    %cst_17 = arith.constant dense<0.000000e+00> : vector<4x8xf32>
    %20 = tpu.matmul %19, %18, %cst_17 {dimension_numbers = #tpu.dot_dimension_numbers<[1], [0], [0], [1], [0, 0, 1, 1], [], []>, precision = #tpu.contract_precision<fp32>} : vector<4x8xf32>, vector<8x8xf32>, vector<4x8xf32> -> vector<4x8xf32>
    %c0_18 = arith.constant 0 : index
    %c0_19 = arith.constant 0 : index
    %21 = vector.load %arg9[%c0_18, %c0_19] : memref<4x1xf32, #tpu.memory_space<vmem>>, vector<4x1xf32>
    %22 = vector.broadcast %21 : vector<4x1xf32> to vector<4x8xf32>
    %23 = arith.addf %20, %22 : vector<4x8xf32>
    %24 = vector.extract_strided_slice %23 {offsets = [0, 0], sizes = [1, 8], strides = [1, 1]} : vector<4x8xf32> to vector<1x8xf32>
    %25 = vector.extract_strided_slice %23 {offsets = [1, 0], sizes = [1, 8], strides = [1, 1]} : vector<4x8xf32> to vector<1x8xf32>
    %26 = arith.maximumf %24, %25 : vector<1x8xf32>
    %27 = vector.extract_strided_slice %23 {offsets = [2, 0], sizes = [1, 8], strides = [1, 1]} : vector<4x8xf32> to vector<1x8xf32>
    %28 = vector.extract_strided_slice %23 {offsets = [3, 0], sizes = [1, 8], strides = [1, 1]} : vector<4x8xf32> to vector<1x8xf32>
    %29 = arith.maximumf %27, %28 : vector<1x8xf32>
    %30 = arith.maximumf %26, %29 : vector<1x8xf32>
    %31 = vector.broadcast %30 : vector<1x8xf32> to vector<4x8xf32>
    %32 = arith.subf %23, %31 : vector<4x8xf32>
    %33 = math.exp %32 : vector<4x8xf32>
    %34 = vector.extract_strided_slice %33 {offsets = [0, 0], sizes = [1, 8], strides = [1, 1]} : vector<4x8xf32> to vector<1x8xf32>
    %35 = vector.extract_strided_slice %33 {offsets = [1, 0], sizes = [1, 8], strides = [1, 1]} : vector<4x8xf32> to vector<1x8xf32>
    %36 = arith.addf %34, %35 : vector<1x8xf32>
    %37 = vector.extract_strided_slice %33 {offsets = [2, 0], sizes = [1, 8], strides = [1, 1]} : vector<4x8xf32> to vector<1x8xf32>
    %38 = arith.addf %36, %37 : vector<1x8xf32>
    %39 = vector.extract_strided_slice %33 {offsets = [3, 0], sizes = [1, 8], strides = [1, 1]} : vector<4x8xf32> to vector<1x8xf32>
    %40 = arith.addf %38, %39 : vector<1x8xf32>
    %cst_20 = arith.constant 1.000000e+00 : f32
    %41 = vector.broadcast %cst_20 : f32 to vector<1x8xf32>
    %42 = arith.divf %41, %40 : vector<1x8xf32>
    %43 = vector.broadcast %42 : vector<1x8xf32> to vector<4x8xf32>
    %44 = arith.mulf %33, %43 : vector<4x8xf32>
    %c0_21 = arith.constant 0 : index
    %c0_22 = arith.constant 0 : index
    %45 = vector.load %arg10[%c0_21, %c0_22] : memref<4x8xf32, #tpu.memory_space<vmem>>, vector<4x8xf32>
    tpu.vector_store %arg10[%c0_21, %c0_22], %44 {strides = array<i32>} : memref<4x8xf32, #tpu.memory_space<vmem>>, vector<4x8xf32>,
    return
  }
  func.func @transform_0(%arg0: i32) -> (i32, i32) {
    %c0_i32 = arith.constant 0 : i32
    %c0_i32_0 = arith.constant 0 : i32
    return %arg0, %c0_i32 : i32, i32
  }
  func.func @transform_1(%arg0: i32) -> (i32, i32) {
    %c0_i32 = arith.constant 0 : i32
    %c0_i32_0 = arith.constant 0 : i32
    %c0_i32_1 = arith.constant 0 : i32
    return %c0_i32, %c0_i32_0 : i32, i32
  }
  func.func @transform_2(%arg0: i32) -> (i32, i32) {
    %c0_i32 = arith.constant 0 : i32
    %c0_i32_0 = arith.constant 0 : i32
    %c0_i32_1 = arith.constant 0 : i32
    return %c0_i32, %c0_i32_0 : i32, i32
  }
  func.func @transform_3(%arg0: i32) -> (i32, i32) {
    %c0_i32 = arith.constant 0 : i32
    %c0_i32_0 = arith.constant 0 : i32
    %c0_i32_1 = arith.constant 0 : i32
    return %c0_i32, %c0_i32_0 : i32, i32
  }
  func.func @transform_4(%arg0: i32) -> (i32, i32) {
    %c0_i32 = arith.constant 0 : i32
    %c0_i32_0 = arith.constant 0 : i32
    %c0_i32_1 = arith.constant 0 : i32
    return %c0_i32, %c0_i32_0 : i32, i32
  }
  func.func @transform_5(%arg0: i32) -> (i32, i32) {
    %c0_i32 = arith.constant 0 : i32
    %c0_i32_0 = arith.constant 0 : i32
    %c0_i32_1 = arith.constant 0 : i32
    return %c0_i32, %c0_i32_0 : i32, i32
  }
  func.func @transform_6(%arg0: i32) -> (i32, i32) {
    %c0_i32 = arith.constant 0 : i32
    %c0_i32_0 = arith.constant 0 : i32
    %c0_i32_1 = arith.constant 0 : i32
    return %c0_i32, %c0_i32_0 : i32, i32
  }
  func.func @transform_7(%arg0: i32) -> (i32, i32) {
    %c0_i32 = arith.constant 0 : i32
    %c0_i32_0 = arith.constant 0 : i32
    %c0_i32_1 = arith.constant 0 : i32
    return %c0_i32, %c0_i32_0 : i32, i32
  }
  func.func @transform_8(%arg0: i32) -> (i32, i32) {
    %c0_i32 = arith.constant 0 : i32
    %c0_i32_0 = arith.constant 0 : i32
    %c0_i32_1 = arith.constant 0 : i32
    return %c0_i32, %c0_i32_0 : i32, i32
  }
  func.func @transform_9(%arg0: i32) -> (i32, i32) {
    %c0_i32 = arith.constant 0 : i32
    %c0_i32_0 = arith.constant 0 : i32
    return %c0_i32, %arg0 : i32, i32
  }
}

</mosaic_0001>

<llo_original>
// kernel: _policy_forward.1
$region0: #{_policy_forward.1}
  #allocation0 [shape = 'u32[]', space=smem, size = 0x4, offset = 0x4, fixed_abs, tag = 'smem constant byte address 0x4 - core index']
  #allocation1 [shape = 'u32[144,128]{1,0:T(1,128)}', space=vmem, size = 0x12000, scoped, tag = 'internal scratch']
  %s0 = inlined_call_operand.vmem [shape: f32[8,8], index: 0, kind: input, shape index: {}]
  %s1 = inlined_call_operand.vmem [shape: f32[16,8], index: 1, kind: input, shape index: {}]
  %s2 = inlined_call_operand.vmem [shape: f32[16,1], index: 2, kind: input, shape index: {}]
  %s3 = inlined_call_operand.vmem [shape: f32[16,16], index: 3, kind: input, shape index: {}]
  %s4 = inlined_call_operand.vmem [shape: f32[16,1], index: 4, kind: input, shape index: {}]
  %s5 = inlined_call_operand.vmem [shape: f32[8,16], index: 5, kind: input, shape index: {}]
  %s6 = inlined_call_operand.vmem [shape: f32[8,1], index: 6, kind: input, shape index: {}]
  %s7 = inlined_call_operand.vmem [shape: f32[4,8], index: 7, kind: input, shape index: {}]
  %s8 = inlined_call_operand.vmem [shape: f32[4,1], index: 8, kind: input, shape index: {}]
  %s9 = inlined_call_operand.hbm [shape: f32[4,8], index: 9, kind: output, shape index: {}]
  %s10 = sld [smem:[#allocation0]]
  $region46: #{_policy_forward.1} parent=0
    _
  %s12 = ssub.s32 1, %s10
  %s13 = scalar_select 0, %s12, %s10
  $region1: #{_policy_forward.1} parent=0
    #allocation2 [shape = 'u8[2048]{0}', space=vmem, size = 0x800, scoped, tag = 'output window, operand 0, single buffered']
    #allocation3 [shape = 's32[1]{0}', space=sflag, size = 0x4, scoped, tag = 'scoped memory for _policy_forward.1']
    %14 = vsyncpa [#allocation3], 0
    // Predicated region
    $region2: #{_policy_forward.1} parent=1 // pred_check
      _
    $region3: #{_policy_forward.1} parent=1 // pred_check_branch
      %16 = sbr.rel (0) target = $region5
    $region4: #{_policy_forward.1} parent=1 // pred_region
      _
    $region5: #{_policy_forward.1} parent=1 // pred_fallthru
      _
    // Predicated region
    $region6: #{_policy_forward.1} parent=1 // pred_check
      _
    $region7: #{_policy_forward.1} parent=1 // pred_check_branch
      %18 = sbr.rel (0) target = $region9
    $region8: #{_policy_forward.1} parent=1 // pred_region
      _
    $region9: #{_policy_forward.1} parent=1 // pred_fallthru
      _
    // Predicated region
    $region10: #{_policy_forward.1} parent=1 // pred_check
      _
    $region11: #{_policy_forward.1} parent=1 // pred_check_branch
      %20 = sbr.rel (0) target = $region13
    $region12: #{_policy_forward.1} parent=1 // pred_region
      _
    $region13: #{_policy_forward.1} parent=1 // pred_fallthru
      _
    // Predicated region
    $region14: #{_policy_forward.1} parent=1 // pred_check
      _
    $region15: #{_policy_forward.1} parent=1 // pred_check_branch
      %22 = sbr.rel (0) target = $region17
    $region16: #{_policy_forward.1} parent=1 // pred_region
      _
    $region17: #{_policy_forward.1} parent=1 // pred_fallthru
      _
    // Predicated region
    $region18: #{_policy_forward.1} parent=1 // pred_check
      _
    $region19: #{_policy_forward.1} parent=1 // pred_check_branch
      %24 = sbr.rel (0) target = $region21
    $region20: #{_policy_forward.1} parent=1 // pred_region
      _
    $region21: #{_policy_forward.1} parent=1 // pred_fallthru
      _
    // Predicated region
    $region22: #{_policy_forward.1} parent=1 // pred_check
      _
    $region23: #{_policy_forward.1} parent=1 // pred_check_branch
      %26 = sbr.rel (0) target = $region25
    $region24: #{_policy_forward.1} parent=1 // pred_region
      _
    $region25: #{_policy_forward.1} parent=1 // pred_fallthru
      _
    // Predicated region
    $region26: #{_policy_forward.1} parent=1 // pred_check
      _
    $region27: #{_policy_forward.1} parent=1 // pred_check_branch
      %28 = sbr.rel (0) target = $region29
    $region28: #{_policy_forward.1} parent=1 // pred_region
      _
    $region29: #{_policy_forward.1} parent=1 // pred_fallthru
      _
    // Predicated region
    $region30: #{_policy_forward.1} parent=1 // pred_check
      _
    $region31: #{_policy_forward.1} parent=1 // pred_check_branch
      %30 = sbr.rel (0) target = $region33
    $region32: #{_policy_forward.1} parent=1 // pred_region
      _
    $region33: #{_policy_forward.1} parent=1 // pred_fallthru
      _
    // Predicated region
    $region34: #{_policy_forward.1} parent=1 // pred_check
      _
    $region35: #{_policy_forward.1} parent=1 // pred_check_branch
      %32 = sbr.rel (0) target = $region37
    $region36: #{_policy_forward.1} parent=1 // pred_region
      _
    $region37: #{_policy_forward.1} parent=1 // pred_fallthru
      _
    %v33 = vld [vmem:[%s0] sm:$0xff]
    %v34 = vld [vmem:[%s1] sm:$0xff]
    %v35 = vld [vmem:[%s1 + $0x8] sm:$0xff]
    %v36 = vld [vmem:[%s2] sm:$0xff]
    %v37 = vld [vmem:[%s2 + $0x8] sm:$0xff]
    %39 = vset.pattern.permute.xlu0 0
    %40 = vperm.xlu0 %39, %v36
    %v41 = vpop.permute.xlu0 %40
    %44 = vset.pattern.permute.xlu0 0
    %45 = vperm.xlu0 %44, %v37
    %v46 = vpop.permute.xlu0 %45
    %vm48 = vcmask 64512
    %v50 = vsel %vm48, %v34, 0
    %v53 = vsel %vm48, %v35, 0
    %v56 = vsel %vm48, %v33, 0
    %58 = vmatprep.subr.mxu0 0.0
    %v59 = vand.u32 %v56, 4294901760
    %60 = vmatpush1.xpose.msra.mxu0 %v59
    %61 = vmatprep.subr.mxu0 0.0
    %62 = vmatpush1.xpose.msra.mxu0 0.0
    %63 = vmatprep.subr.mxu0 0.0
    %64 = vmatpush1.xpose.msra.mxu0 0.0
    %65 = vmatprep.subr.mxu0 0.0
    %66 = vmatpush1.xpose.msra.mxu0 0.0
    %67 = vmatprep.subr.mxu0 0.0
    %68 = vmatpush1.xpose.msra.mxu0 0.0
    %69 = vmatprep.subr.mxu0 0.0
    %70 = vmatpush1.xpose.msra.mxu0 0.0
    %71 = vmatprep.subr.mxu0 0.0
    %72 = vmatpush1.xpose.msra.mxu0 0.0
    %73 = vmatprep.subr.mxu0 0.0
    %74 = vmatpush1.xpose.msra.mxu0 0.0
    %75 = vmatprep.subr.mxu0 0.0
    %76 = vmatpush1.xpose.msra.mxu0 0.0
    %77 = vmatprep.subr.mxu0 0.0
    %78 = vmatpush1.xpose.msra.mxu0 0.0
    %79 = vmatprep.subr.mxu0 0.0
    %80 = vmatpush1.xpose.msra.mxu0 0.0
    %81 = vmatprep.subr.mxu0 0.0
    %82 = vmatpush1.xpose.msra.mxu0 0.0
    %83 = vmatprep.subr.mxu0 0.0
    %84 = vmatpush1.xpose.msra.mxu0 0.0
    %85 = vmatprep.subr.mxu0 0.0
    %86 = vmatpush1.xpose.msra.mxu0 0.0
    %87 = vmatprep.subr.mxu0 0.0
    %88 = vmatpush1.xpose.msra.mxu0 0.0
    %89 = vmatprep.subr.mxu0 0.0
    %90 = vmatpush1.xpose.msra.mxu0 0.0
    %91 = vmatprep.subr.mxu0 0.0
    %92 = vmatpush1.xpose.msra.mxu0 0.0
    %93 = vmatprep.subr.mxu0 0.0
    %94 = vmatpush1.xpose.msra.mxu0 0.0
    %95 = vmatprep.subr.mxu0 0.0
    %96 = vmatpush1.xpose.msra.mxu0 0.0
    %97 = vmatprep.subr.mxu0 0.0
    %98 = vmatpush1.xpose.msra.mxu0 0.0
    %99 = vmatprep.subr.mxu0 0.0
    %100 = vmatpush1.xpose.msra.mxu0 0.0
    %101 = vmatprep.subr.mxu0 0.0
    %102 = vmatpush1.xpose.msra.mxu0 0.0
    %103 = vmatprep.subr.mxu0 0.0
    %104 = vmatpush1.xpose.msra.mxu0 0.0
    %105 = vmatprep.subr.mxu0 0.0
    %106 = vmatpush1.xpose.msra.mxu0 0.0
    %107 = vmatprep.subr.mxu0 0.0
    %108 = vmatpush1.xpose.msra.mxu0 0.0
    %109 = vmatprep.subr.mxu0 0.0
    %110 = vmatpush1.xpose.msra.mxu0 0.0
    %111 = vmatprep.subr.mxu0 0.0
    %112 = vmatpush1.xpose.msra.mxu0 0.0
    %113 = vmatprep.subr.mxu0 0.0
    %114 = vmatpush1.xpose.msra.mxu0 0.0
    %115 = vmatprep.subr.mxu0 0.0
    %116 = vmatpush1.xpose.msra.mxu0 0.0
    %117 = vmatprep.subr.mxu0 0.0
    %118 = vmatpush1.xpose.msra.mxu0 0.0
    %119 = vmatprep.subr.mxu0 0.0
    %120 = vmatpush1.xpose.msra.mxu0 0.0
    %121 = vmatprep.subr.mxu0 0.0
    %122 = vmatpush1.xpose.msra.mxu0 0.0
    %123 = vmatprep.mubr.f32.mxu0 0.0
    %v124 = vand.u32 %v50, 4294901760
    %v125 = vsub.f32 %v50, %v124
    %v126 = vand.u32 %v125, 4294901760
    %v127 = vsub.f32 %v125, %v126
    %v128 = vand.u32 %v127, 4294901760
    %129 = vmatmul.mubr.f32.gmra.mrb[0].mxu0 %v128
    %v130 = vpop.f32.mrb[0].mxu0
    %v131 = vadd.f32 %v41, %v130
    %v132 = vpop.f32.mrb[0].mxu0
    %133 = vmatprep.mubr.f32.mxu0 0.0
    %v134 = vand.u32 %v53, 4294901760
    %v135 = vsub.f32 %v53, %v134
    %v136 = vand.u32 %v135, 4294901760
    %v137 = vsub.f32 %v135, %v136
    %v138 = vand.u32 %v137, 4294901760
    %139 = vmatmul.mubr.f32.gmra.mrb[0].mxu0 %v138
    %v140 = vpop.f32.mrb[0].mxu0
    %v141 = vadd.f32 %v46, %v140
    %v142 = vpop.f32.mrb[0].mxu0
    %143 = vdwg.mxu0
    %144 = vmatprep.subr.mxu0 0.0
    %v145 = vand.u32 %v56, 4294901760
    %v146 = vsub.f32 %v56, %v145
    %v147 = vand.u32 %v146, 4294901760
    %v148 = vsub.f32 %v146, %v147
    %v149 = vand.u32 %v148, 4294901760
    %150 = vmatpush1.xpose.msra.mxu0 %v149
    %151 = vmatprep.subr.mxu0 0.0
    %152 = vmatpush1.xpose.msra.mxu0 0.0
    %153 = vmatprep.subr.mxu0 0.0
    %154 = vmatpush1.xpose.msra.mxu0 0.0
    %155 = vmatprep.subr.mxu0 0.0
    %156 = vmatpush1.xpose.msra.mxu0 0.0
    %157 = vmatprep.subr.mxu0 0.0
    %158 = vmatpush1.xpose.msra.mxu0 0.0
    %159 = vmatprep.subr.mxu0 0.0
    %160 = vmatpush1.xpose.msra.mxu0 0.0
    %161 = vmatprep.subr.mxu0 0.0
    %162 = vmatpush1.xpose.msra.mxu0 0.0
    %163 = vmatprep.subr.mxu0 0.0
    %164 = vmatpush1.xpose.msra.mxu0 0.0
    %165 = vmatprep.subr.mxu0 0.0
    %166 = vmatpush1.xpose.msra.mxu0 0.0
    %167 = vmatprep.subr.mxu0 0.0
    %168 = vmatpush1.xpose.msra.mxu0 0.0
    %169 = vmatprep.subr.mxu0 0.0
    %170 = vmatpush1.xpose.msra.mxu0 0.0
    %171 = vmatprep.subr.mxu0 0.0
    %172 = vmatpush1.xpose.msra.mxu0 0.0
    %173 = vmatprep.subr.mxu0 0.0
    %174 = vmatpush1.xpose.msra.mxu0 0.0
    %175 = vmatprep.subr.mxu0 0.0
    %176 = vmatpush1.xpose.msra.mxu0 0.0
    %177 = vmatprep.subr.mxu0 0.0
    %178 = vmatpush1.xpose.msra.mxu0 0.0
    %179 = vmatprep.subr.mxu0 0.0
    %180 = vmatpush1.xpose.msra.mxu0 0.0
    %181 = vmatprep.subr.mxu0 0.0
    %182 = vmatpush1.xpose.msra.mxu0 0.0
    %183 = vmatprep.subr.mxu0 0.0
    %184 = vmatpush1.xpose.msra.mxu0 0.0
    %185 = vmatprep.subr.mxu0 0.0
    %186 = vmatpush1.xpose.msra.mxu0 0.0
    %187 = vmatprep.subr.mxu0 0.0
    %188 = vmatpush1.xpose.msra.mxu0 0.0
    %189 = vmatprep.subr.mxu0 0.0
    %190 = vmatpush1.xpose.msra.mxu0 0.0
    %191 = vmatprep.subr.mxu0 0.0
    %192 = vmatpush1.xpose.msra.mxu0 0.0
    %193 = vmatprep.subr.mxu0 0.0
    %194 = vmatpush1.xpose.msra.mxu0 0.0
    %195 = vmatprep.subr.mxu0 0.0
    %196 = vmatpush1.xpose.msra.mxu0 0.0
    %197 = vmatprep.subr.mxu0 0.0
    %198 = vmatpush1.xpose.msra.mxu0 0.0
    %199 = vmatprep.subr.mxu0 0.0
    %200 = vmatpush1.xpose.msra.mxu0 0.0
    %201 = vmatprep.subr.mxu0 0.0
    %202 = vmatpush1.xpose.msra.mxu0 0.0
    %203 = vmatprep.subr.mxu0 0.0
    %204 = vmatpush1.xpose.msra.mxu0 0.0
    %205 = vmatprep.subr.mxu0 0.0
    %206 = vmatpush1.xpose.msra.mxu0 0.0
    %207 = vmatprep.subr.mxu0 0.0
    %208 = vmatpush1.xpose.msra.mxu0 0.0
    %209 = vmatprep.subr.mxu0 0.0
    %210 = vmatpush1.xpose.msra.mxu0 0.0
    %211 = vmatprep.subr.mxu0 0.0
    %212 = vmatpush1.xpose.msra.mxu0 0.0
    %213 = vmatprep.mubr.f32.mxu0 0.0
    %v214 = vand.u32 %v50, 4294901760
    %215 = vmatmul.mubr.f32.gmra.mrb[0].mxu0 %v214
    %v216 = vpop.f32.mrb[0].mxu0
    %v217 = vadd.f32 %v131, %v216
    %v218 = vpop.f32.mrb[0].mxu0
    %219 = vmatprep.mubr.f32.mxu0 0.0
    %v220 = vand.u32 %v53, 4294901760
    %221 = vmatmul.mubr.f32.gmra.mrb[0].mxu0 %v220
    %v222 = vpop.f32.mrb[0].mxu0
    %v223 = vadd.f32 %v141, %v222
    %v224 = vpop.f32.mrb[0].mxu0
    %225 = vdwg.mxu0
    %226 = vmatprep.subr.mxu0 0.0
    %v227 = vand.u32 %v56, 4294901760
    %v228 = vsub.f32 %v56, %v227
    %229 = vmatpush1.xpose.msra.mxu0 %v228
    %230 = vmatprep.subr.mxu0 0.0
    %231 = vmatpush1.xpose.msra.mxu0 0.0
    %232 = vmatprep.subr.mxu0 0.0
    %233 = vmatpush1.xpose.msra.mxu0 0.0
    %234 = vmatprep.subr.mxu0 0.0
    %235 = vmatpush1.xpose.msra.mxu0 0.0
    %236 = vmatprep.subr.mxu0 0.0
    %237 = vmatpush1.xpose.msra.mxu0 0.0
    %238 = vmatprep.subr.mxu0 0.0
    %239 = vmatpush1.xpose.msra.mxu0 0.0
    %240 = vmatprep.subr.mxu0 0.0
    %241 = vmatpush1.xpose.msra.mxu0 0.0
    %242 = vmatprep.subr.mxu0 0.0
    %243 = vmatpush1.xpose.msra.mxu0 0.0
    %244 = vmatprep.subr.mxu0 0.0
    %245 = vmatpush1.xpose.msra.mxu0 0.0
    %246 = vmatprep.subr.mxu0 0.0
    %247 = vmatpush1.xpose.msra.mxu0 0.0
    %248 = vmatprep.subr.mxu0 0.0
    %249 = vmatpush1.xpose.msra.mxu0 0.0
    %250 = vmatprep.subr.mxu0 0.0
    %251 = vmatpush1.xpose.msra.mxu0 0.0
    %252 = vmatprep.subr.mxu0 0.0
    %253 = vmatpush1.xpose.msra.mxu0 0.0
    %254 = vmatprep.subr.mxu0 0.0
    %255 = vmatpush1.xpose.msra.mxu0 0.0
    %256 = vmatprep.subr.mxu0 0.0
    %257 = vmatpush1.xpose.msra.mxu0 0.0
    %258 = vmatprep.subr.mxu0 0.0
    %259 = vmatpush1.xpose.msra.mxu0 0.0
    %260 = vmatprep.subr.mxu0 0.0
    %261 = vmatpush1.xpose.msra.mxu0 0.0
    %262 = vmatprep.subr.mxu0 0.0
    %263 = vmatpush1.xpose.msra.mxu0 0.0
    %264 = vmatprep.subr.mxu0 0.0
    %265 = vmatpush1.xpose.msra.mxu0 0.0
    %266 = vmatprep.subr.mxu0 0.0
    %267 = vmatpush1.xpose.msra.mxu0 0.0
    %268 = vmatprep.subr.mxu0 0.0
    %269 = vmatpush1.xpose.msra.mxu0 0.0
    %270 = vmatprep.subr.mxu0 0.0
    %271 = vmatpush1.xpose.msra.mxu0 0.0
    %272 = vmatprep.subr.mxu0 0.0
    %273 = vmatpush1.xpose.msra.mxu0 0.0
    %274 = vmatprep.subr.mxu0 0.0
    %275 = vmatpush1.xpose.msra.mxu0 0.0
    %276 = vmatprep.subr.mxu0 0.0
    %277 = vmatpush1.xpose.msra.mxu0 0.0
    %278 = vmatprep.subr.mxu0 0.0
    %279 = vmatpush1.xpose.msra.mxu0 0.0
    %280 = vmatprep.subr.mxu0 0.0
    %281 = vmatpush1.xpose.msra.mxu0 0.0
    %282 = vmatprep.subr.mxu0 0.0
    %283 = vmatpush1.xpose.msra.mxu0 0.0
    %284 = vmatprep.subr.mxu0 0.0
    %285 = vmatpush1.xpose.msra.mxu0 0.0
    %286 = vmatprep.subr.mxu0 0.0
    %287 = vmatpush1.xpose.msra.mxu0 0.0
    %288 = vmatprep.subr.mxu0 0.0
    %289 = vmatpush1.xpose.msra.mxu0 0.0
    %290 = vmatprep.subr.mxu0 0.0
    %291 = vmatpush1.xpose.msra.mxu0 0.0
    %292 = vmatprep.mubr.f32.mxu0 0.0
    %v293 = vand.u32 %v50, 4294901760
    %v294 = vsub.f32 %v50, %v293
    %295 = vmatmul.mubr.f32.gmra.mrb[0].mxu0 %v294
    %v296 = vpop.f32.mrb[0].mxu0
    %v297 = vadd.f32 %v217, %v296
    %v298 = vpop.f32.mrb[0].mxu0
    %299 = vmatprep.mubr.f32.mxu0 0.0
    %v300 = vand.u32 %v53, 4294901760
    %v301 = vsub.f32 %v53, %v300
    %302 = vmatmul.mubr.f32.gmra.mrb[0].mxu0 %v301
    %v303 = vpop.f32.mrb[0].mxu0
    %v304 = vadd.f32 %v223, %v303
    %v305 = vpop.f32.mrb[0].mxu0
    %306 = vdwg.mxu0
    %307 = vmatprep.subr.mxu0 0.0
    %v308 = vand.u32 %v56, 4294901760
    %309 = vmatpush1.xpose.msra.mxu0 %v308
    %310 = vmatprep.subr.mxu0 0.0
    %311 = vmatpush1.xpose.msra.mxu0 0.0
    %312 = vmatprep.subr.mxu0 0.0
    %313 = vmatpush1.xpose.msra.mxu0 0.0
    %314 = vmatprep.subr.mxu0 0.0
    %315 = vmatpush1.xpose.msra.mxu0 0.0
    %316 = vmatprep.subr.mxu0 0.0
    %317 = vmatpush1.xpose.msra.mxu0 0.0
    %318 = vmatprep.subr.mxu0 0.0
    %319 = vmatpush1.xpose.msra.mxu0 0.0
    %320 = vmatprep.subr.mxu0 0.0
    %321 = vmatpush1.xpose.msra.mxu0 0.0
    %322 = vmatprep.subr.mxu0 0.0
    %323 = vmatpush1.xpose.msra.mxu0 0.0
    %324 = vmatprep.subr.mxu0 0.0
    %325 = vmatpush1.xpose.msra.mxu0 0.0
    %326 = vmatprep.subr.mxu0 0.0
    %327 = vmatpush1.xpose.msra.mxu0 0.0
    %328 = vmatprep.subr.mxu0 0.0
    %329 = vmatpush1.xpose.msra.mxu0 0.0
    %330 = vmatprep.subr.mxu0 0.0
    %331 = vmatpush1.xpose.msra.mxu0 0.0
    %332 = vmatprep.subr.mxu0 0.0
    %333 = vmatpush1.xpose.msra.mxu0 0.0
    %334 = vmatprep.subr.mxu0 0.0
    %335 = vmatpush1.xpose.msra.mxu0 0.0
    %336 = vmatprep.subr.mxu0 0.0
    %337 = vmatpush1.xpose.msra.mxu0 0.0
    %338 = vmatprep.subr.mxu0 0.0
    %339 = vmatpush1.xpose.msra.mxu0 0.0
    %340 = vmatprep.subr.mxu0 0.0
    %341 = vmatpush1.xpose.msra.mxu0 0.0
    %342 = vmatprep.subr.mxu0 0.0
    %343 = vmatpush1.xpose.msra.mxu0 0.0
    %344 = vmatprep.subr.mxu0 0.0
    %345 = vmatpush1.xpose.msra.mxu0 0.0
    %346 = vmatprep.subr.mxu0 0.0
    %347 = vmatpush1.xpose.msra.mxu0 0.0
    %348 = vmatprep.subr.mxu0 0.0
    %349 = vmatpush1.xpose.msra.mxu0 0.0
    %350 = vmatprep.subr.mxu0 0.0
    %351 = vmatpush1.xpose.msra.mxu0 0.0
    %352 = vmatprep.subr.mxu0 0.0
    %353 = vmatpush1.xpose.msra.mxu0 0.0
    %354 = vmatprep.subr.mxu0 0.0
    %355 = vmatpush1.xpose.msra.mxu0 0.0
    %356 = vmatprep.subr.mxu0 0.0
    %357 = vmatpush1.xpose.msra.mxu0 0.0
    %358 = vmatprep.subr.mxu0 0.0
    %359 = vmatpush1.xpose.msra.mxu0 0.0
    %360 = vmatprep.subr.mxu0 0.0
    %361 = vmatpush1.xpose.msra.mxu0 0.0
    %362 = vmatprep.subr.mxu0 0.0
    %363 = vmatpush1.xpose.msra.mxu0 0.0
    %364 = vmatprep.subr.mxu0 0.0
    %365 = vmatpush1.xpose.msra.mxu0 0.0
    %366 = vmatprep.subr.mxu0 0.0
    %367 = vmatpush1.xpose.msra.mxu0 0.0
    %368 = vmatprep.subr.mxu0 0.0
    %369 = vmatpush1.xpose.msra.mxu0 0.0
    %370 = vmatprep.subr.mxu0 0.0
    %371 = vmatpush1.xpose.msra.mxu0 0.0
    %372 = vmatprep.mubr.f32.mxu0 0.0
    %v373 = vand.u32 %v50, 4294901760
    %v374 = vsub.f32 %v50, %v373
    %v375 = vand.u32 %v374, 4294901760
    %376 = vmatmul.mubr.f32.gmra.mrb[0].mxu0 %v375
    %v377 = vpop.f32.mrb[0].mxu0
    %v378 = vadd.f32 %v297, %v377
    %v379 = vpop.f32.mrb[0].mxu0
    %380 = vmatprep.mubr.f32.mxu0 0.0
    %v381 = vand.u32 %v53, 4294901760
    %v382 = vsub.f32 %v53, %v381
    %v383 = vand.u32 %v382, 4294901760
    %384 = vmatmul.mubr.f32.gmra.mrb[0].mxu0 %v383
    %v385 = vpop.f32.mrb[0].mxu0
    %v386 = vadd.f32 %v304, %v385
    %v387 = vpop.f32.mrb[0].mxu0
    %388 = vdwg.mxu0
    %389 = vmatprep.subr.mxu0 0.0
    %v390 = vand.u32 %v56, 4294901760
    %v391 = vsub.f32 %v56, %v390
    %v392 = vand.u32 %v391, 4294901760
    %393 = vmatpush1.xpose.msra.mxu0 %v392
    %394 = vmatprep.subr.mxu0 0.0
    %395 = vmatpush1.xpose.msra.mxu0 0.0
    %396 = vmatprep.subr.mxu0 0.0
    %397 = vmatpush1.xpose.msra.mxu0 0.0
    %398 = vmatprep.subr.mxu0 0.0
    %399 = vmatpush1.xpose.msra.mxu0 0.0
    %400 = vmatprep.subr.mxu0 0.0
    %401 = vmatpush1.xpose.msra.mxu0 0.0
    %402 = vmatprep.subr.mxu0 0.0
    %403 = vmatpush1.xpose.msra.mxu0 0.0
    %404 = vmatprep.subr.mxu0 0.0
    %405 = vmatpush1.xpose.msra.mxu0 0.0
    %406 = vmatprep.subr.mxu0 0.0
    %407 = vmatpush1.xpose.msra.mxu0 0.0
    %408 = vmatprep.subr.mxu0 0.0
    %409 = vmatpush1.xpose.msra.mxu0 0.0
    %410 = vmatprep.subr.mxu0 0.0
    %411 = vmatpush1.xpose.msra.mxu0 0.0
    %412 = vmatprep.subr.mxu0 0.0
    %413 = vmatpush1.xpose.msra.mxu0 0.0
    %414 = vmatprep.subr.mxu0 0.0
    %415 = vmatpush1.xpose.msra.mxu0 0.0
    %416 = vmatprep.subr.mxu0 0.0
    %417 = vmatpush1.xpose.msra.mxu0 0.0
    %418 = vmatprep.subr.mxu0 0.0
    %419 = vmatpush1.xpose.msra.mxu0 0.0
    %420 = vmatprep.subr.mxu0 0.0
    %421 = vmatpush1.xpose.msra.mxu0 0.0
    %422 = vmatprep.subr.mxu0 0.0
    %423 = vmatpush1.xpose.msra.mxu0 0.0
    %424 = vmatprep.subr.mxu0 0.0
    %425 = vmatpush1.xpose.msra.mxu0 0.0
    %426 = vmatprep.subr.mxu0 0.0
    %427 = vmatpush1.xpose.msra.mxu0 0.0
    %428 = vmatprep.subr.mxu0 0.0
    %429 = vmatpush1.xpose.msra.mxu0 0.0
    %430 = vmatprep.subr.mxu0 0.0
    %431 = vmatpush1.xpose.msra.mxu0 0.0
    %432 = vmatprep.subr.mxu0 0.0
    %433 = vmatpush1.xpose.msra.mxu0 0.0
    %434 = vmatprep.subr.mxu0 0.0
    %435 = vmatpush1.xpose.msra.mxu0 0.0
    %436 = vmatprep.subr.mxu0 0.0
    %437 = vmatpush1.xpose.msra.mxu0 0.0
    %438 = vmatprep.subr.mxu0 0.0
    %439 = vmatpush1.xpose.msra.mxu0 0.0
    %440 = vmatprep.subr.mxu0 0.0
    %441 = vmatpush1.xpose.msra.mxu0 0.0
    %442 = vmatprep.subr.mxu0 0.0
    %443 = vmatpush1.xpose.msra.mxu0 0.0
    %444 = vmatprep.subr.mxu0 0.0
    %445 = vmatpush1.xpose.msra.mxu0 0.0
    %446 = vmatprep.subr.mxu0 0.0
    %447 = vmatpush1.xpose.msra.mxu0 0.0
    %448 = vmatprep.subr.mxu0 0.0
    %449 = vmatpush1.xpose.msra.mxu0 0.0
    %450 = vmatprep.subr.mxu0 0.0
    %451 = vmatpush1.xpose.msra.mxu0 0.0
    %452 = vmatprep.subr.mxu0 0.0
    %453 = vmatpush1.xpose.msra.mxu0 0.0
    %454 = vmatprep.subr.mxu0 0.0
    %455 = vmatpush1.xpose.msra.mxu0 0.0
    %456 = vmatprep.mubr.f32.mxu0 0.0
    %v457 = vand.u32 %v50, 4294901760
    %458 = vmatmul.mubr.f32.gmra.mrb[0].mxu0 %v457
    %v459 = vpop.f32.mrb[0].mxu0
    %v460 = vadd.f32 %v378, %v459
    %v461 = vpop.f32.mrb[0].mxu0
    %462 = vmatprep.mubr.f32.mxu0 0.0
    %v463 = vand.u32 %v53, 4294901760
    %464 = vmatmul.mubr.f32.gmra.mrb[0].mxu0 %v463
    %v465 = vpop.f32.mrb[0].mxu0
    %v466 = vadd.f32 %v386, %v465
    %v467 = vpop.f32.mrb[0].mxu0
    %468 = vdwg.mxu0
    %469 = vmatprep.subr.mxu0 0.0
    %v470 = vand.u32 %v56, 4294901760
    %471 = vmatpush1.xpose.msra.mxu0 %v470
    %472 = vmatprep.subr.mxu0 0.0
    %473 = vmatpush1.xpose.msra.mxu0 0.0
    %474 = vmatprep.subr.mxu0 0.0
    %475 = vmatpush1.xpose.msra.mxu0 0.0
    %476 = vmatprep.subr.mxu0 0.0
    %477 = vmatpush1.xpose.msra.mxu0 0.0
    %478 = vmatprep.subr.mxu0 0.0
    %479 = vmatpush1.xpose.msra.mxu0 0.0
    %480 = vmatprep.subr.mxu0 0.0
    %481 = vmatpush1.xpose.msra.mxu0 0.0
    %482 = vmatprep.subr.mxu0 0.0
    %483 = vmatpush1.xpose.msra.mxu0 0.0
    %484 = vmatprep.subr.mxu0 0.0
    %485 = vmatpush1.xpose.msra.mxu0 0.0
    %486 = vmatprep.subr.mxu0 0.0
    %487 = vmatpush1.xpose.msra.mxu0 0.0
    %488 = vmatprep.subr.mxu0 0.0
    %489 = vmatpush1.xpose.msra.mxu0 0.0
    %490 = vmatprep.subr.mxu0 0.0
    %491 = vmatpush1.xpose.msra.mxu0 0.0
    %492 = vmatprep.subr.mxu0 0.0
    %493 = vmatpush1.xpose.msra.mxu0 0.0
    %494 = vmatprep.subr.mxu0 0.0
    %495 = vmatpush1.xpose.msra.mxu0 0.0
    %496 = vmatprep.subr.mxu0 0.0
    %497 = vmatpush1.xpose.msra.mxu0 0.0
    %498 = vmatprep.subr.mxu0 0.0
    %499 = vmatpush1.xpose.msra.mxu0 0.0
    %500 = vmatprep.subr.mxu0 0.0
    %501 = vmatpush1.xpose.msra.mxu0 0.0
    %502 = vmatprep.subr.mxu0 0.0
    %503 = vmatpush1.xpose.msra.mxu0 0.0
    %504 = vmatprep.subr.mxu0 0.0
    %505 = vmatpush1.xpose.msra.mxu0 0.0
    %506 = vmatprep.subr.mxu0 0.0
    %507 = vmatpush1.xpose.msra.mxu0 0.0
    %508 = vmatprep.subr.mxu0 0.0
    %509 = vmatpush1.xpose.msra.mxu0 0.0
    %510 = vmatprep.subr.mxu0 0.0
    %511 = vmatpush1.xpose.msra.mxu0 0.0
    %512 = vmatprep.subr.mxu0 0.0
    %513 = vmatpush1.xpose.msra.mxu0 0.0
    %514 = vmatprep.subr.mxu0 0.0
    %515 = vmatpush1.xpose.msra.mxu0 0.0
    %516 = vmatprep.subr.mxu0 0.0
    %517 = vmatpush1.xpose.msra.mxu0 0.0
    %518 = vmatprep.subr.mxu0 0.0
    %519 = vmatpush1.xpose.msra.mxu0 0.0
    %520 = vmatprep.subr.mxu0 0.0
    %521 = vmatpush1.xpose.msra.mxu0 0.0
    %522 = vmatprep.subr.mxu0 0.0
    %523 = vmatpush1.xpose.msra.mxu0 0.0
    %524 = vmatprep.subr.mxu0 0.0
    %525 = vmatpush1.xpose.msra.mxu0 0.0
    %526 = vmatprep.subr.mxu0 0.0
    %527 = vmatpush1.xpose.msra.mxu0 0.0
    %528 = vmatprep.subr.mxu0 0.0
    %529 = vmatpush1.xpose.msra.mxu0 0.0
    %530 = vmatprep.subr.mxu0 0.0
    %531 = vmatpush1.xpose.msra.mxu0 0.0
    %532 = vmatprep.subr.mxu0 0.0
    %533 = vmatpush1.xpose.msra.mxu0 0.0
    %534 = vmatprep.mubr.f32.mxu0 0.0
    %v535 = vand.u32 %v50, 4294901760
    %536 = vmatmul.mubr.f32.gmra.mrb[0].mxu0 %v535
    %v537 = vpop.f32.mrb[0].mxu0
    %v538 = vadd.f32 %v460, %v537
    %v539 = vpop.f32.mrb[0].mxu0
    %540 = vmatprep.mubr.f32.mxu0 0.0
    %v541 = vand.u32 %v53, 4294901760
    %542 = vmatmul.mubr.f32.gmra.mrb[0].mxu0 %v541
    %v543 = vpop.f32.mrb[0].mxu0
    %v544 = vadd.f32 %v466, %v543
    %v545 = vpop.f32.mrb[0].mxu0
    %546 = vdwg.mxu0
    %v547 = vtanh.pop %v538
    %v548 = vtanh.pop %v544
    %v549 = vld [vmem:[%s3] sm:$0xff]
    %v550 = vld [vmem:[%s3 + $0x8] sm:$0xff]
    %v551 = vld [vmem:[%s4] sm:$0xff]
    %v552 = vld [vmem:[%s4 + $0x8] sm:$0xff]
    %554 = vset.pattern.permute.xlu0 0
    %555 = vperm.xlu0 %554, %v551
    %v556 = vpop.permute.xlu0 %555
    %559 = vset.pattern.permute.xlu0 0
    %560 = vperm.xlu0 %559, %v552
    %v561 = vpop.permute.xlu0 %560
    %vm563 = vcmask 130048
    %v565 = vsel %vm563, %v549, 0
    %v568 = vsel %vm563, %v550, 0
    %570 = vmatprep.subr.mxu0 0.0
    %v571 = vand.u32 %v547, 4294901760
    %572 = vmatpush1.msra.mxu0 %v571
    %573 = vmatprep.subr.mxu0 0.0
    %v574 = vand.u32 %v548, 4294901760
    %575 = vmatpush1.msra.mxu0 %v574
    %576 = vmatprep.subr.mxu0 0.0
    %577 = vmatpush1.msra.mxu0 0.0
    %578 = vmatprep.subr.mxu0 0.0
    %579 = vmatpush1.msra.mxu0 0.0
    %580 = vmatprep.subr.mxu0 0.0
    %581 = vmatpush1.msra.mxu0 0.0
    %582 = vmatprep.subr.mxu0 0.0
    %583 = vmatpush1.msra.mxu0 0.0
    %584 = vmatprep.subr.mxu0 0.0
    %585 = vmatpush1.msra.mxu0 0.0
    %586 = vmatprep.subr.mxu0 0.0
    %587 = vmatpush1.msra.mxu0 0.0
    %588 = vmatprep.subr.mxu0 0.0
    %589 = vmatpush1.msra.mxu0 0.0
    %590 = vmatprep.subr.mxu0 0.0
    %591 = vmatpush1.msra.mxu0 0.0
    %592 = vmatprep.subr.mxu0 0.0
    %593 = vmatpush1.msra.mxu0 0.0
    %594 = vmatprep.subr.mxu0 0.0
    %595 = vmatpush1.msra.mxu0 0.0
    %596 = vmatprep.subr.mxu0 0.0
    %597 = vmatpush1.msra.mxu0 0.0
    %598 = vmatprep.subr.mxu0 0.0
    %599 = vmatpush1.msra.mxu0 0.0
    %600 = vmatprep.subr.mxu0 0.0
    %601 = vmatpush1.msra.mxu0 0.0
    %602 = vmatprep.subr.mxu0 0.0
    %603 = vmatpush1.msra.mxu0 0.0
    %604 = vmatprep.subr.mxu0 0.0
    %605 = vmatpush1.msra.mxu0 0.0
    %606 = vmatprep.subr.mxu0 0.0
    %607 = vmatpush1.msra.mxu0 0.0
    %608 = vmatprep.subr.mxu0 0.0
    %609 = vmatpush1.msra.mxu0 0.0
    %610 = vmatprep.subr.mxu0 0.0
    %611 = vmatpush1.msra.mxu0 0.0
    %612 = vmatprep.subr.mxu0 0.0
    %613 = vmatpush1.msra.mxu0 0.0
    %614 = vmatprep.subr.mxu0 0.0
    %615 = vmatpush1.msra.mxu0 0.0
    %616 = vmatprep.subr.mxu0 0.0
    %617 = vmatpush1.msra.mxu0 0.0
    %618 = vmatprep.subr.mxu0 0.0
    %619 = vmatpush1.msra.mxu0 0.0
    %620 = vmatprep.subr.mxu0 0.0
    %621 = vmatpush1.msra.mxu0 0.0
    %622 = vmatprep.subr.mxu0 0.0
    %623 = vmatpush1.msra.mxu0 0.0
    %624 = vmatprep.subr.mxu0 0.0
    %625 = vmatpush1.msra.mxu0 0.0
    %626 = vmatprep.subr.mxu0 0.0
    %627 = vmatpush1.msra.mxu0 0.0
    %628 = vmatprep.subr.mxu0 0.0
    %629 = vmatpush1.msra.mxu0 0.0
    %630 = vmatprep.subr.mxu0 0.0
    %631 = vmatpush1.msra.mxu0 0.0
    %632 = vmatprep.subr.mxu0 0.0
    %633 = vmatpush1.msra.mxu0 0.0
    %634 = vmatprep.subr.mxu0 0.0
    %635 = vmatpush1.msra.mxu0 0.0
    %636 = vmatprep.mubr.f32.mxu0 0.0
    %v637 = vand.u32 %v565, 4294901760
    %v638 = vsub.f32 %v565, %v637
    %v639 = vand.u32 %v638, 4294901760
    %v640 = vsub.f32 %v638, %v639
    %v641 = vand.u32 %v640, 4294901760
    %642 = vmatmul.mubr.f32.gmra.mrb[0].mxu0 %v641
    %v643 = vpop.f32.mrb[0].mxu0
    %v644 = vadd.f32 %v556, %v643
    %v645 = vpop.f32.mrb[0].mxu0
    %646 = vmatprep.mubr.f32.mxu0 0.0
    %v647 = vand.u32 %v568, 4294901760
    %v648 = vsub.f32 %v568, %v647
    %v649 = vand.u32 %v648, 4294901760
    %v650 = vsub.f32 %v648, %v649
    %v651 = vand.u32 %v650, 4294901760
    %652 = vmatmul.mubr.f32.gmra.mrb[0].mxu0 %v651
    %v653 = vpop.f32.mrb[0].mxu0
    %v654 = vadd.f32 %v561, %v653
    %v655 = vpop.f32.mrb[0].mxu0
    %656 = vdwg.mxu0
    %657 = vmatprep.subr.mxu0 0.0
    %v658 = vand.u32 %v547, 4294901760
    %v659 = vsub.f32 %v547, %v658
    %v660 = vand.u32 %v659, 4294901760
    %v661 = vsub.f32 %v659, %v660
    %v662 = vand.u32 %v661, 4294901760
    %663 = vmatpush1.msra.mxu0 %v662
    %664 = vmatprep.subr.mxu0 0.0
    %v665 = vand.u32 %v548, 4294901760
    %v666 = vsub.f32 %v548, %v665
    %v667 = vand.u32 %v666, 4294901760
    %v668 = vsub.f32 %v666, %v667
    %v669 = vand.u32 %v668, 4294901760
    %670 = vmatpush1.msra.mxu0 %v669
    %671 = vmatprep.subr.mxu0 0.0
    %672 = vmatpush1.msra.mxu0 0.0
    %673 = vmatprep.subr.mxu0 0.0
    %674 = vmatpush1.msra.mxu0 0.0
    %675 = vmatprep.subr.mxu0 0.0
    %676 = vmatpush1.msra.mxu0 0.0
    %677 = vmatprep.subr.mxu0 0.0
    %678 = vmatpush1.msra.mxu0 0.0
    %679 = vmatprep.subr.mxu0 0.0
    %680 = vmatpush1.msra.mxu0 0.0
    %681 = vmatprep.subr.mxu0 0.0
    %682 = vmatpush1.msra.mxu0 0.0
    %683 = vmatprep.subr.mxu0 0.0
    %684 = vmatpush1.msra.mxu0 0.0
    %685 = vmatprep.subr.mxu0 0.0
    %686 = vmatpush1.msra.mxu0 0.0
    %687 = vmatprep.subr.mxu0 0.0
    %688 = vmatpush1.msra.mxu0 0.0
    %689 = vmatprep.subr.mxu0 0.0
    %690 = vmatpush1.msra.mxu0 0.0
    %691 = vmatprep.subr.mxu0 0.0
    %692 = vmatpush1.msra.mxu0 0.0
    %693 = vmatprep.subr.mxu0 0.0
    %694 = vmatpush1.msra.mxu0 0.0
    %695 = vmatprep.subr.mxu0 0.0
    %696 = vmatpush1.msra.mxu0 0.0
    %697 = vmatprep.subr.mxu0 0.0
    %698 = vmatpush1.msra.mxu0 0.0
    %699 = vmatprep.subr.mxu0 0.0
    %700 = vmatpush1.msra.mxu0 0.0
    %701 = vmatprep.subr.mxu0 0.0
    %702 = vmatpush1.msra.mxu0 0.0
    %703 = vmatprep.subr.mxu0 0.0
    %704 = vmatpush1.msra.mxu0 0.0
    %705 = vmatprep.subr.mxu0 0.0
    %706 = vmatpush1.msra.mxu0 0.0
    %707 = vmatprep.subr.mxu0 0.0
    %708 = vmatpush1.msra.mxu0 0.0
    %709 = vmatprep.subr.mxu0 0.0
    %710 = vmatpush1.msra.mxu0 0.0
    %711 = vmatprep.subr.mxu0 0.0
    %712 = vmatpush1.msra.mxu0 0.0
    %713 = vmatprep.subr.mxu0 0.0
    %714 = vmatpush1.msra.mxu0 0.0
    %715 = vmatprep.subr.mxu0 0.0
    %716 = vmatpush1.msra.mxu0 0.0
    %717 = vmatprep.subr.mxu0 0.0
    %718 = vmatpush1.msra.mxu0 0.0
    %719 = vmatprep.subr.mxu0 0.0
    %720 = vmatpush1.msra.mxu0 0.0
    %721 = vmatprep.subr.mxu0 0.0
    %722 = vmatpush1.msra.mxu0 0.0
    %723 = vmatprep.subr.mxu0 0.0
    %724 = vmatpush1.msra.mxu0 0.0
    %725 = vmatprep.subr.mxu0 0.0
    %726 = vmatpush1.msra.mxu0 0.0
    %727 = vmatprep.subr.mxu0 0.0
    %728 = vmatpush1.msra.mxu0 0.0
    %729 = vmatprep.subr.mxu0 0.0
    %730 = vmatpush1.msra.mxu0 0.0
    %731 = vmatprep.mubr.f32.mxu0 0.0
    %v732 = vand.u32 %v565, 4294901760
    %733 = vmatmul.mubr.f32.gmra.mrb[0].mxu0 %v732
    %v734 = vpop.f32.mrb[0].mxu0
    %v735 = vadd.f32 %v644, %v734
    %v736 = vpop.f32.mrb[0].mxu0
    %737 = vmatprep.mubr.f32.mxu0 0.0
    %v738 = vand.u32 %v568, 4294901760
    %739 = vmatmul.mubr.f32.gmra.mrb[0].mxu0 %v738
    %v740 = vpop.f32.mrb[0].mxu0
    %v741 = vadd.f32 %v654, %v740
    %v742 = vpop.f32.mrb[0].mxu0
    %743 = vdwg.mxu0
    %744 = vmatprep.subr.mxu0 0.0
    %v745 = vand.u32 %v547, 4294901760
    %v746 = vsub.f32 %v547, %v745
    %747 = vmatpush1.msra.mxu0 %v746
    %748 = vmatprep.subr.mxu0 0.0
    %v749 = vand.u32 %v548, 4294901760
    %v750 = vsub.f32 %v548, %v749
    %751 = vmatpush1.msra.mxu0 %v750
    %752 = vmatprep.subr.mxu0 0.0
    %753 = vmatpush1.msra.mxu0 0.0
    %754 = vmatprep.subr.mxu0 0.0
    %755 = vmatpush1.msra.mxu0 0.0
    %756 = vmatprep.subr.mxu0 0.0
    %757 = vmatpush1.msra.mxu0 0.0
    %758 = vmatprep.subr.mxu0 0.0
    %759 = vmatpush1.msra.mxu0 0.0
    %760 = vmatprep.subr.mxu0 0.0
    %761 = vmatpush1.msra.mxu0 0.0
    %762 = vmatprep.subr.mxu0 0.0
    %763 = vmatpush1.msra.mxu0 0.0
    %764 = vmatprep.subr.mxu0 0.0
    %765 = vmatpush1.msra.mxu0 0.0
    %766 = vmatprep.subr.mxu0 0.0
    %767 = vmatpush1.msra.mxu0 0.0
    %768 = vmatprep.subr.mxu0 0.0
    %769 = vmatpush1.msra.mxu0 0.0
    %770 = vmatprep.subr.mxu0 0.0
    %771 = vmatpush1.msra.mxu0 0.0
    %772 = vmatprep.subr.mxu0 0.0
    %773 = vmatpush1.msra.mxu0 0.0
    %774 = vmatprep.subr.mxu0 0.0
    %775 = vmatpush1.msra.mxu0 0.0
    %776 = vmatprep.subr.mxu0 0.0
    %777 = vmatpush1.msra.mxu0 0.0
    %778 = vmatprep.subr.mxu0 0.0
    %779 = vmatpush1.msra.mxu0 0.0
    %780 = vmatprep.subr.mxu0 0.0
    %781 = vmatpush1.msra.mxu0 0.0
    %782 = vmatprep.subr.mxu0 0.0
    %783 = vmatpush1.msra.mxu0 0.0
    %784 = vmatprep.subr.mxu0 0.0
    %785 = vmatpush1.msra.mxu0 0.0
    %786 = vmatprep.subr.mxu0 0.0
    %787 = vmatpush1.msra.mxu0 0.0
    %788 = vmatprep.subr.mxu0 0.0
    %789 = vmatpush1.msra.mxu0 0.0
    %790 = vmatprep.subr.mxu0 0.0
    %791 = vmatpush1.msra.mxu0 0.0
    %792 = vmatprep.subr.mxu0 0.0
    %793 = vmatpush1.msra.mxu0 0.0
    %794 = vmatprep.subr.mxu0 0.0
    %795 = vmatpush1.msra.mxu0 0.0
    %796 = vmatprep.subr.mxu0 0.0
    %797 = vmatpush1.msra.mxu0 0.0
    %798 = vmatprep.subr.mxu0 0.0
    %799 = vmatpush1.msra.mxu0 0.0
    %800 = vmatprep.subr.mxu0 0.0
    %801 = vmatpush1.msra.mxu0 0.0
    %802 = vmatprep.subr.mxu0 0.0
    %803 = vmatpush1.msra.mxu0 0.0
    %804 = vmatprep.subr.mxu0 0.0
    %805 = vmatpush1.msra.mxu0 0.0
    %806 = vmatprep.subr.mxu0 0.0
    %807 = vmatpush1.msra.mxu0 0.0
    %808 = vmatprep.subr.mxu0 0.0
    %809 = vmatpush1.msra.mxu0 0.0
    %810 = vmatprep.subr.mxu0 0.0
    %811 = vmatpush1.msra.mxu0 0.0
    %812 = vmatprep.mubr.f32.mxu0 0.0
    %v813 = vand.u32 %v565, 4294901760
    %v814 = vsub.f32 %v565, %v813
    %815 = vmatmul.mubr.f32.gmra.mrb[0].mxu0 %v814
    %v816 = vpop.f32.mrb[0].mxu0
    %v817 = vadd.f32 %v735, %v816
    %v818 = vpop.f32.mrb[0].mxu0
    %819 = vmatprep.mubr.f32.mxu0 0.0
    %v820 = vand.u32 %v568, 4294901760
    %v821 = vsub.f32 %v568, %v820
    %822 = vmatmul.mubr.f32.gmra.mrb[0].mxu0 %v821
    %v823 = vpop.f32.mrb[0].mxu0
    %v824 = vadd.f32 %v741, %v823
    %v825 = vpop.f32.mrb[0].mxu0
    %826 = vdwg.mxu0
    %827 = vmatprep.subr.mxu0 0.0
    %v828 = vand.u32 %v547, 4294901760
    %829 = vmatpush1.msra.mxu0 %v828
    %830 = vmatprep.subr.mxu0 0.0
    %v831 = vand.u32 %v548, 4294901760
    %832 = vmatpush1.msra.mxu0 %v831
    %833 = vmatprep.subr.mxu0 0.0
    %834 = vmatpush1.msra.mxu0 0.0
    %835 = vmatprep.subr.mxu0 0.0
    %836 = vmatpush1.msra.mxu0 0.0
    %837 = vmatprep.subr.mxu0 0.0
    %838 = vmatpush1.msra.mxu0 0.0
    %839 = vmatprep.subr.mxu0 0.0
    %840 = vmatpush1.msra.mxu0 0.0
    %841 = vmatprep.subr.mxu0 0.0
    %842 = vmatpush1.msra.mxu0 0.0
    %843 = vmatprep.subr.mxu0 0.0
    %844 = vmatpush1.msra.mxu0 0.0
    %845 = vmatprep.subr.mxu0 0.0
    %846 = vmatpush1.msra.mxu0 0.0
    %847 = vmatprep.subr.mxu0 0.0
    %848 = vmatpush1.msra.mxu0 0.0
    %849 = vmatprep.subr.mxu0 0.0
    %850 = vmatpush1.msra.mxu0 0.0
    %851 = vmatprep.subr.mxu0 0.0
    %852 = vmatpush1.msra.mxu0 0.0
    %853 = vmatprep.subr.mxu0 0.0
    %854 = vmatpush1.msra.mxu0 0.0
    %855 = vmatprep.subr.mxu0 0.0
    %856 = vmatpush1.msra.mxu0 0.0
    %857 = vmatprep.subr.mxu0 0.0
    %858 = vmatpush1.msra.mxu0 0.0
    %859 = vmatprep.subr.mxu0 0.0
    %860 = vmatpush1.msra.mxu0 0.0
    %861 = vmatprep.subr.mxu0 0.0
    %862 = vmatpush1.msra.mxu0 0.0
    %863 = vmatprep.subr.mxu0 0.0
    %864 = vmatpush1.msra.mxu0 0.0
    %865 = vmatprep.subr.mxu0 0.0
    %866 = vmatpush1.msra.mxu0 0.0
    %867 = vmatprep.subr.mxu0 0.0
    %868 = vmatpush1.msra.mxu0 0.0
    %869 = vmatprep.subr.mxu0 0.0
    %870 = vmatpush1.msra.mxu0 0.0
    %871 = vmatprep.subr.mxu0 0.0
    %872 = vmatpush1.msra.mxu0 0.0
    %873 = vmatprep.subr.mxu0 0.0
    %874 = vmatpush1.msra.mxu0 0.0
    %875 = vmatprep.subr.mxu0 0.0
    %876 = vmatpush1.msra.mxu0 0.0
    %877 = vmatprep.subr.mxu0 0.0
    %878 = vmatpush1.msra.mxu0 0.0
    %879 = vmatprep.subr.mxu0 0.0
    %880 = vmatpush1.msra.mxu0 0.0
    %881 = vmatprep.subr.mxu0 0.0
    %882 = vmatpush1.msra.mxu0 0.0
    %883 = vmatprep.subr.mxu0 0.0
    %884 = vmatpush1.msra.mxu0 0.0
    %885 = vmatprep.subr.mxu0 0.0
    %886 = vmatpush1.msra.mxu0 0.0
    %887 = vmatprep.subr.mxu0 0.0
    %888 = vmatpush1.msra.mxu0 0.0
    %889 = vmatprep.subr.mxu0 0.0
    %890 = vmatpush1.msra.mxu0 0.0
    %891 = vmatprep.subr.mxu0 0.0
    %892 = vmatpush1.msra.mxu0 0.0
    %893 = vmatprep.mubr.f32.mxu0 0.0
    %v894 = vand.u32 %v565, 4294901760
    %v895 = vsub.f32 %v565, %v894
    %v896 = vand.u32 %v895, 4294901760
    %897 = vmatmul.mubr.f32.gmra.mrb[0].mxu0 %v896
    %v898 = vpop.f32.mrb[0].mxu0
    %v899 = vadd.f32 %v817, %v898
    %v900 = vpop.f32.mrb[0].mxu0
    %901 = vmatprep.mubr.f32.mxu0 0.0
    %v902 = vand.u32 %v568, 4294901760
    %v903 = vsub.f32 %v568, %v902
    %v904 = vand.u32 %v903, 4294901760
    %905 = vmatmul.mubr.f32.gmra.mrb[0].mxu0 %v904
    %v906 = vpop.f32.mrb[0].mxu0
    %v907 = vadd.f32 %v824, %v906
    %v908 = vpop.f32.mrb[0].mxu0
    %909 = vdwg.mxu0
    %910 = vmatprep.subr.mxu0 0.0
    %v911 = vand.u32 %v547, 4294901760
    %v912 = vsub.f32 %v547, %v911
    %v913 = vand.u32 %v912, 4294901760
    %914 = vmatpush1.msra.mxu0 %v913
    %915 = vmatprep.subr.mxu0 0.0
    %v916 = vand.u32 %v548, 4294901760
    %v917 = vsub.f32 %v548, %v916
    %v918 = vand.u32 %v917, 4294901760
    %919 = vmatpush1.msra.mxu0 %v918
    %920 = vmatprep.subr.mxu0 0.0
    %921 = vmatpush1.msra.mxu0 0.0
    %922 = vmatprep.subr.mxu0 0.0
    %923 = vmatpush1.msra.mxu0 0.0
    %924 = vmatprep.subr.mxu0 0.0
    %925 = vmatpush1.msra.mxu0 0.0
    %926 = vmatprep.subr.mxu0 0.0
    %927 = vmatpush1.msra.mxu0 0.0
    %928 = vmatprep.subr.mxu0 0.0
    %929 = vmatpush1.msra.mxu0 0.0
    %930 = vmatprep.subr.mxu0 0.0
    %931 = vmatpush1.msra.mxu0 0.0
    %932 = vmatprep.subr.mxu0 0.0
    %933 = vmatpush1.msra.mxu0 0.0
    %934 = vmatprep.subr.mxu0 0.0
    %935 = vmatpush1.msra.mxu0 0.0
    %936 = vmatprep.subr.mxu0 0.0
    %937 = vmatpush1.msra.mxu0 0.0
    %938 = vmatprep.subr.mxu0 0.0
    %939 = vmatpush1.msra.mxu0 0.0
    %940 = vmatprep.subr.mxu0 0.0
    %941 = vmatpush1.msra.mxu0 0.0
    %942 = vmatprep.subr.mxu0 0.0
    %943 = vmatpush1.msra.mxu0 0.0
    %944 = vmatprep.subr.mxu0 0.0
    %945 = vmatpush1.msra.mxu0 0.0
    %946 = vmatprep.subr.mxu0 0.0
    %947 = vmatpush1.msra.mxu0 0.0
    %948 = vmatprep.subr.mxu0 0.0
    %949 = vmatpush1.msra.mxu0 0.0
    %950 = vmatprep.subr.mxu0 0.0
    %951 = vmatpush1.msra.mxu0 0.0
    %952 = vmatprep.subr.mxu0 0.0
    %953 = vmatpush1.msra.mxu0 0.0
    %954 = vmatprep.subr.mxu0 0.0
    %955 = vmatpush1.msra.mxu0 0.0
    %956 = vmatprep.subr.mxu0 0.0
    %957 = vmatpush1.msra.mxu0 0.0
    %958 = vmatprep.subr.mxu0 0.0
    %959 = vmatpush1.msra.mxu0 0.0
    %960 = vmatprep.subr.mxu0 0.0
    %961 = vmatpush1.msra.mxu0 0.0
    %962 = vmatprep.subr.mxu0 0.0
    %963 = vmatpush1.msra.mxu0 0.0
    %964 = vmatprep.subr.mxu0 0.0
    %965 = vmatpush1.msra.mxu0 0.0
    %966 = vmatprep.subr.mxu0 0.0
    %967 = vmatpush1.msra.mxu0 0.0
    %968 = vmatprep.subr.mxu0 0.0
    %969 = vmatpush1.msra.mxu0 0.0
    %970 = vmatprep.subr.mxu0 0.0
    %971 = vmatpush1.msra.mxu0 0.0
    %972 = vmatprep.subr.mxu0 0.0
    %973 = vmatpush1.msra.mxu0 0.0
    %974 = vmatprep.subr.mxu0 0.0
    %975 = vmatpush1.msra.mxu0 0.0
    %976 = vmatprep.subr.mxu0 0.0
    %977 = vmatpush1.msra.mxu0 0.0
    %978 = vmatprep.subr.mxu0 0.0
    %979 = vmatpush1.msra.mxu0 0.0
    %980 = vmatprep.mubr.f32.mxu0 0.0
    %v981 = vand.u32 %v565, 4294901760
    %982 = vmatmul.mubr.f32.gmra.mrb[0].mxu0 %v981
    %v983 = vpop.f32.mrb[0].mxu0
    %v984 = vadd.f32 %v899, %v983
    %v985 = vpop.f32.mrb[0].mxu0
    %986 = vmatprep.mubr.f32.mxu0 0.0
    %v987 = vand.u32 %v568, 4294901760
    %988 = vmatmul.mubr.f32.gmra.mrb[0].mxu0 %v987
    %v989 = vpop.f32.mrb[0].mxu0
    %v990 = vadd.f32 %v907, %v989
    %v991 = vpop.f32.mrb[0].mxu0
    %992 = vdwg.mxu0
    %993 = vmatprep.subr.mxu0 0.0
    %v994 = vand.u32 %v547, 4294901760
    %995 = vmatpush1.msra.mxu0 %v994
    %996 = vmatprep.subr.mxu0 0.0
    %v997 = vand.u32 %v548, 4294901760
    %998 = vmatpush1.msra.mxu0 %v997
    %999 = vmatprep.subr.mxu0 0.0
    %1000 = vmatpush1.msra.mxu0 0.0
    %1001 = vmatprep.subr.mxu0 0.0
    %1002 = vmatpush1.msra.mxu0 0.0
    %1003 = vmatprep.subr.mxu0 0.0
    %1004 = vmatpush1.msra.mxu0 0.0
    %1005 = vmatprep.subr.mxu0 0.0
    %1006 = vmatpush1.msra.mxu0 0.0
    %1007 = vmatprep.subr.mxu0 0.0
    %1008 = vmatpush1.msra.mxu0 0.0
    %1009 = vmatprep.subr.mxu0 0.0
    %1010 = vmatpush1.msra.mxu0 0.0
    %1011 = vmatprep.subr.mxu0 0.0
    %1012 = vmatpush1.msra.mxu0 0.0
    %1013 = vmatprep.subr.mxu0 0.0
    %1014 = vmatpush1.msra.mxu0 0.0
    %1015 = vmatprep.subr.mxu0 0.0
    %1016 = vmatpush1.msra.mxu0 0.0
    %1017 = vmatprep.subr.mxu0 0.0
    %1018 = vmatpush1.msra.mxu0 0.0
    %1019 = vmatprep.subr.mxu0 0.0
    %1020 = vmatpush1.msra.mxu0 0.0
    %1021 = vmatprep.subr.mxu0 0.0
    %1022 = vmatpush1.msra.mxu0 0.0
    %1023 = vmatprep.subr.mxu0 0.0
    %1024 = vmatpush1.msra.mxu0 0.0
    %1025 = vmatprep.subr.mxu0 0.0
    %1026 = vmatpush1.msra.mxu0 0.0
    %1027 = vmatprep.subr.mxu0 0.0
    %1028 = vmatpush1.msra.mxu0 0.0
    %1029 = vmatprep.subr.mxu0 0.0
    %1030 = vmatpush1.msra.mxu0 0.0
    %1031 = vmatprep.subr.mxu0 0.0
    %1032 = vmatpush1.msra.mxu0 0.0
    %1033 = vmatprep.subr.mxu0 0.0
    %1034 = vmatpush1.msra.mxu0 0.0
    %1035 = vmatprep.subr.mxu0 0.0
    %1036 = vmatpush1.msra.mxu0 0.0
    %1037 = vmatprep.subr.mxu0 0.0
    %1038 = vmatpush1.msra.mxu0 0.0
    %1039 = vmatprep.subr.mxu0 0.0
    %1040 = vmatpush1.msra.mxu0 0.0
    %1041 = vmatprep.subr.mxu0 0.0
    %1042 = vmatpush1.msra.mxu0 0.0
    %1043 = vmatprep.subr.mxu0 0.0
    %1044 = vmatpush1.msra.mxu0 0.0
    %1045 = vmatprep.subr.mxu0 0.0
    %1046 = vmatpush1.msra.mxu0 0.0
    %1047 = vmatprep.subr.mxu0 0.0
    %1048 = vmatpush1.msra.mxu0 0.0
    %1049 = vmatprep.subr.mxu0 0.0
    %1050 = vmatpush1.msra.mxu0 0.0
    %1051 = vmatprep.subr.mxu0 0.0
    %1052 = vmatpush1.msra.mxu0 0.0
    %1053 = vmatprep.subr.mxu0 0.0
    %1054 = vmatpush1.msra.mxu0 0.0
    %1055 = vmatprep.subr.mxu0 0.0
    %1056 = vmatpush1.msra.mxu0 0.0
    %1057 = vmatprep.subr.mxu0 0.0
    %1058 = vmatpush1.msra.mxu0 0.0
    %1059 = vmatprep.mubr.f32.mxu0 0.0
    %v1060 = vand.u32 %v565, 4294901760
    %1061 = vmatmul.mubr.f32.gmra.mrb[0].mxu0 %v1060
    %v1062 = vpop.f32.mrb[0].mxu0
    %v1063 = vadd.f32 %v984, %v1062
    %v1064 = vpop.f32.mrb[0].mxu0
    %1065 = vmatprep.mubr.f32.mxu0 0.0
    %v1066 = vand.u32 %v568, 4294901760
    %1067 = vmatmul.mubr.f32.gmra.mrb[0].mxu0 %v1066
    %v1068 = vpop.f32.mrb[0].mxu0
    %v1069 = vadd.f32 %v990, %v1068
    %v1070 = vpop.f32.mrb[0].mxu0
    %1071 = vdwg.mxu0
    %v1072 = vtanh.pop %v1063
    %v1073 = vtanh.pop %v1069
    %v1074 = vld [vmem:[%s5] sm:$0xff]
    %v1075 = vld [vmem:[%s6] sm:$0xff]
    %1077 = vset.pattern.permute.xlu0 0
    %1078 = vperm.xlu0 %1077, %v1075
    %v1079 = vpop.permute.xlu0 %1078
    %v1082 = vsel %vm563, %v1074, 0
    %1084 = vmatprep.subr.mxu0 0.0
    %v1085 = vand.u32 %v1072, 4294901760
    %1086 = vmatpush1.msra.mxu0 %v1085
    %1087 = vmatprep.subr.mxu0 0.0
    %v1088 = vand.u32 %v1073, 4294901760
    %1089 = vmatpush1.msra.mxu0 %v1088
    %1090 = vmatprep.subr.mxu0 0.0
    %1091 = vmatpush1.msra.mxu0 0.0
    %1092 = vmatprep.subr.mxu0 0.0
    %1093 = vmatpush1.msra.mxu0 0.0
    %1094 = vmatprep.subr.mxu0 0.0
    %1095 = vmatpush1.msra.mxu0 0.0
    %1096 = vmatprep.subr.mxu0 0.0
    %1097 = vmatpush1.msra.mxu0 0.0
    %1098 = vmatprep.subr.mxu0 0.0
    %1099 = vmatpush1.msra.mxu0 0.0
    %1100 = vmatprep.subr.mxu0 0.0
    %1101 = vmatpush1.msra.mxu0 0.0
    %1102 = vmatprep.subr.mxu0 0.0
    %1103 = vmatpush1.msra.mxu0 0.0
    %1104 = vmatprep.subr.mxu0 0.0
    %1105 = vmatpush1.msra.mxu0 0.0
    %1106 = vmatprep.subr.mxu0 0.0
    %1107 = vmatpush1.msra.mxu0 0.0
    %1108 = vmatprep.subr.mxu0 0.0
    %1109 = vmatpush1.msra.mxu0 0.0
    %1110 = vmatprep.subr.mxu0 0.0
    %1111 = vmatpush1.msra.mxu0 0.0
    %1112 = vmatprep.subr.mxu0 0.0
    %1113 = vmatpush1.msra.mxu0 0.0
    %1114 = vmatprep.subr.mxu0 0.0
    %1115 = vmatpush1.msra.mxu0 0.0
    %1116 = vmatprep.subr.mxu0 0.0
    %1117 = vmatpush1.msra.mxu0 0.0
    %1118 = vmatprep.subr.mxu0 0.0
    %1119 = vmatpush1.msra.mxu0 0.0
    %1120 = vmatprep.subr.mxu0 0.0
    %1121 = vmatpush1.msra.mxu0 0.0
    %1122 = vmatprep.subr.mxu0 0.0
    %1123 = vmatpush1.msra.mxu0 0.0
    %1124 = vmatprep.subr.mxu0 0.0
    %1125 = vmatpush1.msra.mxu0 0.0
    %1126 = vmatprep.subr.mxu0 0.0
    %1127 = vmatpush1.msra.mxu0 0.0
    %1128 = vmatprep.subr.mxu0 0.0
    %1129 = vmatpush1.msra.mxu0 0.0
    %1130 = vmatprep.subr.mxu0 0.0
    %1131 = vmatpush1.msra.mxu0 0.0
    %1132 = vmatprep.subr.mxu0 0.0
    %1133 = vmatpush1.msra.mxu0 0.0
    %1134 = vmatprep.subr.mxu0 0.0
    %1135 = vmatpush1.msra.mxu0 0.0
    %1136 = vmatprep.subr.mxu0 0.0
    %1137 = vmatpush1.msra.mxu0 0.0
    %1138 = vmatprep.subr.mxu0 0.0
    %1139 = vmatpush1.msra.mxu0 0.0
    %1140 = vmatprep.subr.mxu0 0.0
    %1141 = vmatpush1.msra.mxu0 0.0
    %1142 = vmatprep.subr.mxu0 0.0
    %1143 = vmatpush1.msra.mxu0 0.0
    %1144 = vmatprep.subr.mxu0 0.0
    %1145 = vmatpush1.msra.mxu0 0.0
    %1146 = vmatprep.subr.mxu0 0.0
    %1147 = vmatpush1.msra.mxu0 0.0
    %1148 = vmatprep.subr.mxu0 0.0
    %1149 = vmatpush1.msra.mxu0 0.0
    %1150 = vmatprep.mubr.f32.mxu0 0.0
    %v1151 = vand.u32 %v1082, 4294901760
    %v1152 = vsub.f32 %v1082, %v1151
    %v1153 = vand.u32 %v1152, 4294901760
    %v1154 = vsub.f32 %v1152, %v1153
    %v1155 = vand.u32 %v1154, 4294901760
    %1156 = vmatmul.mubr.f32.gmra.mrb[0].mxu0 %v1155
    %v1157 = vpop.f32.mrb[0].mxu0
    %v1158 = vadd.f32 %v1079, %v1157
    %v1159 = vpop.f32.mrb[0].mxu0
    %1160 = vdwg.mxu0
    %1161 = vmatprep.subr.mxu0 0.0
    %v1162 = vand.u32 %v1072, 4294901760
    %v1163 = vsub.f32 %v1072, %v1162
    %v1164 = vand.u32 %v1163, 4294901760
    %v1165 = vsub.f32 %v1163, %v1164
    %v1166 = vand.u32 %v1165, 4294901760
    %1167 = vmatpush1.msra.mxu0 %v1166
    %1168 = vmatprep.subr.mxu0 0.0
    %v1169 = vand.u32 %v1073, 4294901760
    %v1170 = vsub.f32 %v1073, %v1169
    %v1171 = vand.u32 %v1170, 4294901760
    %v1172 = vsub.f32 %v1170, %v1171
    %v1173 = vand.u32 %v1172, 4294901760
    %1174 = vmatpush1.msra.mxu0 %v1173
    %1175 = vmatprep.subr.mxu0 0.0
    %1176 = vmatpush1.msra.mxu0 0.0
    %1177 = vmatprep.subr.mxu0 0.0
    %1178 = vmatpush1.msra.mxu0 0.0
    %1179 = vmatprep.subr.mxu0 0.0
    %1180 = vmatpush1.msra.mxu0 0.0
    %1181 = vmatprep.subr.mxu0 0.0
    %1182 = vmatpush1.msra.mxu0 0.0
    %1183 = vmatprep.subr.mxu0 0.0
    %1184 = vmatpush1.msra.mxu0 0.0
    %1185 = vmatprep.subr.mxu0 0.0
    %1186 = vmatpush1.msra.mxu0 0.0
    %1187 = vmatprep.subr.mxu0 0.0
    %1188 = vmatpush1.msra.mxu0 0.0
    %1189 = vmatprep.subr.mxu0 0.0
    %1190 = vmatpush1.msra.mxu0 0.0
    %1191 = vmatprep.subr.mxu0 0.0
    %1192 = vmatpush1.msra.mxu0 0.0
    %1193 = vmatprep.subr.mxu0 0.0
    %1194 = vmatpush1.msra.mxu0 0.0
    %1195 = vmatprep.subr.mxu0 0.0
    %1196 = vmatpush1.msra.mxu0 0.0
    %1197 = vmatprep.subr.mxu0 0.0
    %1198 = vmatpush1.msra.mxu0 0.0
    %1199 = vmatprep.subr.mxu0 0.0
    %1200 = vmatpush1.msra.mxu0 0.0
    %1201 = vmatprep.subr.mxu0 0.0
    %1202 = vmatpush1.msra.mxu0 0.0
    %1203 = vmatprep.subr.mxu0 0.0
    %1204 = vmatpush1.msra.mxu0 0.0
    %1205 = vmatprep.subr.mxu0 0.0
    %1206 = vmatpush1.msra.mxu0 0.0
    %1207 = vmatprep.subr.mxu0 0.0
    %1208 = vmatpush1.msra.mxu0 0.0
    %1209 = vmatprep.subr.mxu0 0.0
    %1210 = vmatpush1.msra.mxu0 0.0
    %1211 = vmatprep.subr.mxu0 0.0
    %1212 = vmatpush1.msra.mxu0 0.0
    %1213 = vmatprep.subr.mxu0 0.0
    %1214 = vmatpush1.msra.mxu0 0.0
    %1215 = vmatprep.subr.mxu0 0.0
    %1216 = vmatpush1.msra.mxu0 0.0
    %1217 = vmatprep.subr.mxu0 0.0
    %1218 = vmatpush1.msra.mxu0 0.0
    %1219 = vmatprep.subr.mxu0 0.0
    %1220 = vmatpush1.msra.mxu0 0.0
    %1221 = vmatprep.subr.mxu0 0.0
    %1222 = vmatpush1.msra.mxu0 0.0
    %1223 = vmatprep.subr.mxu0 0.0
    %1224 = vmatpush1.msra.mxu0 0.0
    %1225 = vmatprep.subr.mxu0 0.0
    %1226 = vmatpush1.msra.mxu0 0.0
    %1227 = vmatprep.subr.mxu0 0.0
    %1228 = vmatpush1.msra.mxu0 0.0
    %1229 = vmatprep.subr.mxu0 0.0
    %1230 = vmatpush1.msra.mxu0 0.0
    %1231 = vmatprep.subr.mxu0 0.0
    %1232 = vmatpush1.msra.mxu0 0.0
    %1233 = vmatprep.subr.mxu0 0.0
    %1234 = vmatpush1.msra.mxu0 0.0
    %1235 = vmatprep.mubr.f32.mxu0 0.0
    %v1236 = vand.u32 %v1082, 4294901760
    %1237 = vmatmul.mubr.f32.gmra.mrb[0].mxu0 %v1236
    %v1238 = vpop.f32.mrb[0].mxu0
    %v1239 = vadd.f32 %v1158, %v1238
    %v1240 = vpop.f32.mrb[0].mxu0
    %1241 = vdwg.mxu0
    %1242 = vmatprep.subr.mxu0 0.0
    %v1243 = vand.u32 %v1072, 4294901760
    %v1244 = vsub.f32 %v1072, %v1243
    %1245 = vmatpush1.msra.mxu0 %v1244
    %1246 = vmatprep.subr.mxu0 0.0
    %v1247 = vand.u32 %v1073, 4294901760
    %v1248 = vsub.f32 %v1073, %v1247
    %1249 = vmatpush1.msra.mxu0 %v1248
    %1250 = vmatprep.subr.mxu0 0.0
    %1251 = vmatpush1.msra.mxu0 0.0
    %1252 = vmatprep.subr.mxu0 0.0
    %1253 = vmatpush1.msra.mxu0 0.0
    %1254 = vmatprep.subr.mxu0 0.0
    %1255 = vmatpush1.msra.mxu0 0.0
    %1256 = vmatprep.subr.mxu0 0.0
    %1257 = vmatpush1.msra.mxu0 0.0
    %1258 = vmatprep.subr.mxu0 0.0
    %1259 = vmatpush1.msra.mxu0 0.0
    %1260 = vmatprep.subr.mxu0 0.0
    %1261 = vmatpush1.msra.mxu0 0.0
    %1262 = vmatprep.subr.mxu0 0.0
    %1263 = vmatpush1.msra.mxu0 0.0
    %1264 = vmatprep.subr.mxu0 0.0
    %1265 = vmatpush1.msra.mxu0 0.0
    %1266 = vmatprep.subr.mxu0 0.0
    %1267 = vmatpush1.msra.mxu0 0.0
    %1268 = vmatprep.subr.mxu0 0.0
    %1269 = vmatpush1.msra.mxu0 0.0
    %1270 = vmatprep.subr.mxu0 0.0
    %1271 = vmatpush1.msra.mxu0 0.0
    %1272 = vmatprep.subr.mxu0 0.0
    %1273 = vmatpush1.msra.mxu0 0.0
    %1274 = vmatprep.subr.mxu0 0.0
    %1275 = vmatpush1.msra.mxu0 0.0
    %1276 = vmatprep.subr.mxu0 0.0
    %1277 = vmatpush1.msra.mxu0 0.0
    %1278 = vmatprep.subr.mxu0 0.0
    %1279 = vmatpush1.msra.mxu0 0.0
    %1280 = vmatprep.subr.mxu0 0.0
    %1281 = vmatpush1.msra.mxu0 0.0
    %1282 = vmatprep.subr.mxu0 0.0
    %1283 = vmatpush1.msra.mxu0 0.0
    %1284 = vmatprep.subr.mxu0 0.0
    %1285 = vmatpush1.msra.mxu0 0.0
    %1286 = vmatprep.subr.mxu0 0.0
    %1287 = vmatpush1.msra.mxu0 0.0
    %1288 = vmatprep.subr.mxu0 0.0
    %1289 = vmatpush1.msra.mxu0 0.0
    %1290 = vmatprep.subr.mxu0 0.0
    %1291 = vmatpush1.msra.mxu0 0.0
    %1292 = vmatprep.subr.mxu0 0.0
    %1293 = vmatpush1.msra.mxu0 0.0
    %1294 = vmatprep.subr.mxu0 0.0
    %1295 = vmatpush1.msra.mxu0 0.0
    %1296 = vmatprep.subr.mxu0 0.0
    %1297 = vmatpush1.msra.mxu0 0.0
    %1298 = vmatprep.subr.mxu0 0.0
    %1299 = vmatpush1.msra.mxu0 0.0
    %1300 = vmatprep.subr.mxu0 0.0
    %1301 = vmatpush1.msra.mxu0 0.0
    %1302 = vmatprep.subr.mxu0 0.0
    %1303 = vmatpush1.msra.mxu0 0.0
    %1304 = vmatprep.subr.mxu0 0.0
    %1305 = vmatpush1.msra.mxu0 0.0
    %1306 = vmatprep.subr.mxu0 0.0
    %1307 = vmatpush1.msra.mxu0 0.0
    %1308 = vmatprep.subr.mxu0 0.0
    %1309 = vmatpush1.msra.mxu0 0.0
    %1310 = vmatprep.mubr.f32.mxu0 0.0
    %v1311 = vand.u32 %v1082, 4294901760
    %v1312 = vsub.f32 %v1082, %v1311
    %1313 = vmatmul.mubr.f32.gmra.mrb[0].mxu0 %v1312
    %v1314 = vpop.f32.mrb[0].mxu0
    %v1315 = vadd.f32 %v1239, %v1314
    %v1316 = vpop.f32.mrb[0].mxu0
    %1317 = vdwg.mxu0
    %1318 = vmatprep.subr.mxu0 0.0
    %v1319 = vand.u32 %v1072, 4294901760
    %1320 = vmatpush1.msra.mxu0 %v1319
    %1321 = vmatprep.subr.mxu0 0.0
    %v1322 = vand.u32 %v1073, 4294901760
    %1323 = vmatpush1.msra.mxu0 %v1322
    %1324 = vmatprep.subr.mxu0 0.0
    %1325 = vmatpush1.msra.mxu0 0.0
    %1326 = vmatprep.subr.mxu0 0.0
    %1327 = vmatpush1.msra.mxu0 0.0
    %1328 = vmatprep.subr.mxu0 0.0
    %1329 = vmatpush1.msra.mxu0 0.0
    %1330 = vmatprep.subr.mxu0 0.0
    %1331 = vmatpush1.msra.mxu0 0.0
    %1332 = vmatprep.subr.mxu0 0.0
    %1333 = vmatpush1.msra.mxu0 0.0
    %1334 = vmatprep.subr.mxu0 0.0
    %1335 = vmatpush1.msra.mxu0 0.0
    %1336 = vmatprep.subr.mxu0 0.0
    %1337 = vmatpush1.msra.mxu0 0.0
    %1338 = vmatprep.subr.mxu0 0.0
    %1339 = vmatpush1.msra.mxu0 0.0
    %1340 = vmatprep.subr.mxu0 0.0
    %1341 = vmatpush1.msra.mxu0 0.0
    %1342 = vmatprep.subr.mxu0 0.0
    %1343 = vmatpush1.msra.mxu0 0.0
    %1344 = vmatprep.subr.mxu0 0.0
    %1345 = vmatpush1.msra.mxu0 0.0
    %1346 = vmatprep.subr.mxu0 0.0
    %1347 = vmatpush1.msra.mxu0 0.0
    %1348 = vmatprep.subr.mxu0 0.0
    %1349 = vmatpush1.msra.mxu0 0.0
    %1350 = vmatprep.subr.mxu0 0.0
    %1351 = vmatpush1.msra.mxu0 0.0
    %1352 = vmatprep.subr.mxu0 0.0
    %1353 = vmatpush1.msra.mxu0 0.0
    %1354 = vmatprep.subr.mxu0 0.0
    %1355 = vmatpush1.msra.mxu0 0.0
    %1356 = vmatprep.subr.mxu0 0.0
    %1357 = vmatpush1.msra.mxu0 0.0
    %1358 = vmatprep.subr.mxu0 0.0
    %1359 = vmatpush1.msra.mxu0 0.0
    %1360 = vmatprep.subr.mxu0 0.0
    %1361 = vmatpush1.msra.mxu0 0.0
    %1362 = vmatprep.subr.mxu0 0.0
    %1363 = vmatpush1.msra.mxu0 0.0
    %1364 = vmatprep.subr.mxu0 0.0
    %1365 = vmatpush1.msra.mxu0 0.0
    %1366 = vmatprep.subr.mxu0 0.0
    %1367 = vmatpush1.msra.mxu0 0.0
    %1368 = vmatprep.subr.mxu0 0.0
    %1369 = vmatpush1.msra.mxu0 0.0
    %1370 = vmatprep.subr.mxu0 0.0
    %1371 = vmatpush1.msra.mxu0 0.0
    %1372 = vmatprep.subr.mxu0 0.0
    %1373 = vmatpush1.msra.mxu0 0.0
    %1374 = vmatprep.subr.mxu0 0.0
    %1375 = vmatpush1.msra.mxu0 0.0
    %1376 = vmatprep.subr.mxu0 0.0
    %1377 = vmatpush1.msra.mxu0 0.0
    %1378 = vmatprep.subr.mxu0 0.0
    %1379 = vmatpush1.msra.mxu0 0.0
    %1380 = vmatprep.subr.mxu0 0.0
    %1381 = vmatpush1.msra.mxu0 0.0
    %1382 = vmatprep.subr.mxu0 0.0
    %1383 = vmatpush1.msra.mxu0 0.0
    %1384 = vmatprep.mubr.f32.mxu0 0.0
    %v1385 = vand.u32 %v1082, 4294901760
    %v1386 = vsub.f32 %v1082, %v1385
    %v1387 = vand.u32 %v1386, 4294901760
    %1388 = vmatmul.mubr.f32.gmra.mrb[0].mxu0 %v1387
    %v1389 = vpop.f32.mrb[0].mxu0
    %v1390 = vadd.f32 %v1315, %v1389
    %v1391 = vpop.f32.mrb[0].mxu0
    %1392 = vdwg.mxu0
    %1393 = vmatprep.subr.mxu0 0.0
    %v1394 = vand.u32 %v1072, 4294901760
    %v1395 = vsub.f32 %v1072, %v1394
    %v1396 = vand.u32 %v1395, 4294901760
    %1397 = vmatpush1.msra.mxu0 %v1396
    %1398 = vmatprep.subr.mxu0 0.0
    %v1399 = vand.u32 %v1073, 4294901760
    %v1400 = vsub.f32 %v1073, %v1399
    %v1401 = vand.u32 %v1400, 4294901760
    %1402 = vmatpush1.msra.mxu0 %v1401
    %1403 = vmatprep.subr.mxu0 0.0
    %1404 = vmatpush1.msra.mxu0 0.0
    %1405 = vmatprep.subr.mxu0 0.0
    %1406 = vmatpush1.msra.mxu0 0.0
    %1407 = vmatprep.subr.mxu0 0.0
    %1408 = vmatpush1.msra.mxu0 0.0
    %1409 = vmatprep.subr.mxu0 0.0
    %1410 = vmatpush1.msra.mxu0 0.0
    %1411 = vmatprep.subr.mxu0 0.0
    %1412 = vmatpush1.msra.mxu0 0.0
    %1413 = vmatprep.subr.mxu0 0.0
    %1414 = vmatpush1.msra.mxu0 0.0
    %1415 = vmatprep.subr.mxu0 0.0
    %1416 = vmatpush1.msra.mxu0 0.0
    %1417 = vmatprep.subr.mxu0 0.0
    %1418 = vmatpush1.msra.mxu0 0.0
    %1419 = vmatprep.subr.mxu0 0.0
    %1420 = vmatpush1.msra.mxu0 0.0
    %1421 = vmatprep.subr.mxu0 0.0
    %1422 = vmatpush1.msra.mxu0 0.0
    %1423 = vmatprep.subr.mxu0 0.0
    %1424 = vmatpush1.msra.mxu0 0.0
    %1425 = vmatprep.subr.mxu0 0.0
    %1426 = vmatpush1.msra.mxu0 0.0
    %1427 = vmatprep.subr.mxu0 0.0
    %1428 = vmatpush1.msra.mxu0 0.0
    %1429 = vmatprep.subr.mxu0 0.0
    %1430 = vmatpush1.msra.mxu0 0.0
    %1431 = vmatprep.subr.mxu0 0.0
    %1432 = vmatpush1.msra.mxu0 0.0
    %1433 = vmatprep.subr.mxu0 0.0
    %1434 = vmatpush1.msra.mxu0 0.0
    %1435 = vmatprep.subr.mxu0 0.0
    %1436 = vmatpush1.msra.mxu0 0.0
    %1437 = vmatprep.subr.mxu0 0.0
    %1438 = vmatpush1.msra.mxu0 0.0
    %1439 = vmatprep.subr.mxu0 0.0
    %1440 = vmatpush1.msra.mxu0 0.0
    %1441 = vmatprep.subr.mxu0 0.0
    %1442 = vmatpush1.msra.mxu0 0.0
    %1443 = vmatprep.subr.mxu0 0.0
    %1444 = vmatpush1.msra.mxu0 0.0
    %1445 = vmatprep.subr.mxu0 0.0
    %1446 = vmatpush1.msra.mxu0 0.0
    %1447 = vmatprep.subr.mxu0 0.0
    %1448 = vmatpush1.msra.mxu0 0.0
    %1449 = vmatprep.subr.mxu0 0.0
    %1450 = vmatpush1.msra.mxu0 0.0
    %1451 = vmatprep.subr.mxu0 0.0
    %1452 = vmatpush1.msra.mxu0 0.0
    %1453 = vmatprep.subr.mxu0 0.0
    %1454 = vmatpush1.msra.mxu0 0.0
    %1455 = vmatprep.subr.mxu0 0.0
    %1456 = vmatpush1.msra.mxu0 0.0
    %1457 = vmatprep.subr.mxu0 0.0
    %1458 = vmatpush1.msra.mxu0 0.0
    %1459 = vmatprep.subr.mxu0 0.0
    %1460 = vmatpush1.msra.mxu0 0.0
    %1461 = vmatprep.subr.mxu0 0.0
    %1462 = vmatpush1.msra.mxu0 0.0
    %1463 = vmatprep.mubr.f32.mxu0 0.0
    %v1464 = vand.u32 %v1082, 4294901760
    %1465 = vmatmul.mubr.f32.gmra.mrb[0].mxu0 %v1464
    %v1466 = vpop.f32.mrb[0].mxu0
    %v1467 = vadd.f32 %v1390, %v1466
    %v1468 = vpop.f32.mrb[0].mxu0
    %1469 = vdwg.mxu0
    %1470 = vmatprep.subr.mxu0 0.0
    %v1471 = vand.u32 %v1072, 4294901760
    %1472 = vmatpush1.msra.mxu0 %v1471
    %1473 = vmatprep.subr.mxu0 0.0
    %v1474 = vand.u32 %v1073, 4294901760
    %1475 = vmatpush1.msra.mxu0 %v1474
    %1476 = vmatprep.subr.mxu0 0.0
    %1477 = vmatpush1.msra.mxu0 0.0
    %1478 = vmatprep.subr.mxu0 0.0
    %1479 = vmatpush1.msra.mxu0 0.0
    %1480 = vmatprep.subr.mxu0 0.0
    %1481 = vmatpush1.msra.mxu0 0.0
    %1482 = vmatprep.subr.mxu0 0.0
    %1483 = vmatpush1.msra.mxu0 0.0
    %1484 = vmatprep.subr.mxu0 0.0
    %1485 = vmatpush1.msra.mxu0 0.0
    %1486 = vmatprep.subr.mxu0 0.0
    %1487 = vmatpush1.msra.mxu0 0.0
    %1488 = vmatprep.subr.mxu0 0.0
    %1489 = vmatpush1.msra.mxu0 0.0
    %1490 = vmatprep.subr.mxu0 0.0
    %1491 = vmatpush1.msra.mxu0 0.0
    %1492 = vmatprep.subr.mxu0 0.0
    %1493 = vmatpush1.msra.mxu0 0.0
    %1494 = vmatprep.subr.mxu0 0.0
    %1495 = vmatpush1.msra.mxu0 0.0
    %1496 = vmatprep.subr.mxu0 0.0
    %1497 = vmatpush1.msra.mxu0 0.0
    %1498 = vmatprep.subr.mxu0 0.0
    %1499 = vmatpush1.msra.mxu0 0.0
    %1500 = vmatprep.subr.mxu0 0.0
    %1501 = vmatpush1.msra.mxu0 0.0
    %1502 = vmatprep.subr.mxu0 0.0
    %1503 = vmatpush1.msra.mxu0 0.0
    %1504 = vmatprep.subr.mxu0 0.0
    %1505 = vmatpush1.msra.mxu0 0.0
    %1506 = vmatprep.subr.mxu0 0.0
    %1507 = vmatpush1.msra.mxu0 0.0
    %1508 = vmatprep.subr.mxu0 0.0
    %1509 = vmatpush1.msra.mxu0 0.0
    %1510 = vmatprep.subr.mxu0 0.0
    %1511 = vmatpush1.msra.mxu0 0.0
    %1512 = vmatprep.subr.mxu0 0.0
    %1513 = vmatpush1.msra.mxu0 0.0
    %1514 = vmatprep.subr.mxu0 0.0
    %1515 = vmatpush1.msra.mxu0 0.0
    %1516 = vmatprep.subr.mxu0 0.0
    %1517 = vmatpush1.msra.mxu0 0.0
    %1518 = vmatprep.subr.mxu0 0.0
    %1519 = vmatpush1.msra.mxu0 0.0
    %1520 = vmatprep.subr.mxu0 0.0
    %1521 = vmatpush1.msra.mxu0 0.0
    %1522 = vmatprep.subr.mxu0 0.0
    %1523 = vmatpush1.msra.mxu0 0.0
    %1524 = vmatprep.subr.mxu0 0.0
    %1525 = vmatpush1.msra.mxu0 0.0
    %1526 = vmatprep.subr.mxu0 0.0
    %1527 = vmatpush1.msra.mxu0 0.0
    %1528 = vmatprep.subr.mxu0 0.0
    %1529 = vmatpush1.msra.mxu0 0.0
    %1530 = vmatprep.subr.mxu0 0.0
    %1531 = vmatpush1.msra.mxu0 0.0
    %1532 = vmatprep.subr.mxu0 0.0
    %1533 = vmatpush1.msra.mxu0 0.0
    %1534 = vmatprep.subr.mxu0 0.0
    %1535 = vmatpush1.msra.mxu0 0.0
    %1536 = vmatprep.mubr.f32.mxu0 0.0
    %v1537 = vand.u32 %v1082, 4294901760
    %1538 = vmatmul.mubr.f32.gmra.mrb[0].mxu0 %v1537
    %v1539 = vpop.f32.mrb[0].mxu0
    %v1540 = vadd.f32 %v1467, %v1539
    %v1541 = vpop.f32.mrb[0].mxu0
    %1542 = vdwg.mxu0
    %v1543 = vtanh.pop %v1540
    %v1544 = vld [vmem:[%s7] sm:$0xf]
    %v1545 = vld [vmem:[%s8] sm:$0xf]
    %1547 = vset.pattern.permute.xlu0 0
    %1548 = vperm.xlu0 %1547, %v1545
    %v1549 = vpop.permute.xlu0 %1548
    %v1552 = vsel %vm48, %v1544, 0
    %1554 = vmatprep.subr.mxu0 0.0
    %v1555 = vand.u32 %v1543, 4294901760
    %1556 = vmatpush1.msra.mxu0 %v1555
    %1557 = vmatprep.subr.mxu0 0.0
    %1558 = vmatpush1.msra.mxu0 0.0
    %1559 = vmatprep.subr.mxu0 0.0
    %1560 = vmatpush1.msra.mxu0 0.0
    %1561 = vmatprep.subr.mxu0 0.0
    %1562 = vmatpush1.msra.mxu0 0.0
    %1563 = vmatprep.subr.mxu0 0.0
    %1564 = vmatpush1.msra.mxu0 0.0
    %1565 = vmatprep.subr.mxu0 0.0
    %1566 = vmatpush1.msra.mxu0 0.0
    %1567 = vmatprep.subr.mxu0 0.0
    %1568 = vmatpush1.msra.mxu0 0.0
    %1569 = vmatprep.subr.mxu0 0.0
    %1570 = vmatpush1.msra.mxu0 0.0
    %1571 = vmatprep.subr.mxu0 0.0
    %1572 = vmatpush1.msra.mxu0 0.0
    %1573 = vmatprep.subr.mxu0 0.0
    %1574 = vmatpush1.msra.mxu0 0.0
    %1575 = vmatprep.subr.mxu0 0.0
    %1576 = vmatpush1.msra.mxu0 0.0
    %1577 = vmatprep.subr.mxu0 0.0
    %1578 = vmatpush1.msra.mxu0 0.0
    %1579 = vmatprep.subr.mxu0 0.0
    %1580 = vmatpush1.msra.mxu0 0.0
    %1581 = vmatprep.subr.mxu0 0.0
    %1582 = vmatpush1.msra.mxu0 0.0
    %1583 = vmatprep.subr.mxu0 0.0
    %1584 = vmatpush1.msra.mxu0 0.0
    %1585 = vmatprep.subr.mxu0 0.0
    %1586 = vmatpush1.msra.mxu0 0.0
    %1587 = vmatprep.subr.mxu0 0.0
    %1588 = vmatpush1.msra.mxu0 0.0
    %1589 = vmatprep.subr.mxu0 0.0
    %1590 = vmatpush1.msra.mxu0 0.0
    %1591 = vmatprep.subr.mxu0 0.0
    %1592 = vmatpush1.msra.mxu0 0.0
    %1593 = vmatprep.subr.mxu0 0.0
    %1594 = vmatpush1.msra.mxu0 0.0
    %1595 = vmatprep.subr.mxu0 0.0
    %1596 = vmatpush1.msra.mxu0 0.0
    %1597 = vmatprep.subr.mxu0 0.0
    %1598 = vmatpush1.msra.mxu0 0.0
    %1599 = vmatprep.subr.mxu0 0.0
    %1600 = vmatpush1.msra.mxu0 0.0
    %1601 = vmatprep.subr.mxu0 0.0
    %1602 = vmatpush1.msra.mxu0 0.0
    %1603 = vmatprep.subr.mxu0 0.0
    %1604 = vmatpush1.msra.mxu0 0.0
    %1605 = vmatprep.subr.mxu0 0.0
    %1606 = vmatpush1.msra.mxu0 0.0
    %1607 = vmatprep.subr.mxu0 0.0
    %1608 = vmatpush1.msra.mxu0 0.0
    %1609 = vmatprep.subr.mxu0 0.0
    %1610 = vmatpush1.msra.mxu0 0.0
    %1611 = vmatprep.subr.mxu0 0.0
    %1612 = vmatpush1.msra.mxu0 0.0
    %1613 = vmatprep.subr.mxu0 0.0
    %1614 = vmatpush1.msra.mxu0 0.0
    %1615 = vmatprep.subr.mxu0 0.0
    %1616 = vmatpush1.msra.mxu0 0.0
    %1617 = vmatprep.subr.mxu0 0.0
    %1618 = vmatpush1.msra.mxu0 0.0
    %1619 = vmatprep.mubr.f32.mxu0 0.0
    %v1620 = vand.u32 %v1552, 4294901760
    %v1621 = vsub.f32 %v1552, %v1620
    %v1622 = vand.u32 %v1621, 4294901760
    %v1623 = vsub.f32 %v1621, %v1622
    %v1624 = vand.u32 %v1623, 4294901760
    %1625 = vmatmul.mubr.f32.gmra.mrb[0].mxu0 %v1624
    %v1626 = vpop.f32.mrb[0].mxu0
    %v1627 = vadd.f32 %v1549, %v1626
    %v1628 = vpop.f32.mrb[0].mxu0
    %1629 = vdwg.mxu0
    %1630 = vmatprep.subr.mxu0 0.0
    %v1631 = vand.u32 %v1543, 4294901760
    %v1632 = vsub.f32 %v1543, %v1631
    %v1633 = vand.u32 %v1632, 4294901760
    %v1634 = vsub.f32 %v1632, %v1633
    %v1635 = vand.u32 %v1634, 4294901760
    %1636 = vmatpush1.msra.mxu0 %v1635
    %1637 = vmatprep.subr.mxu0 0.0
    %1638 = vmatpush1.msra.mxu0 0.0
    %1639 = vmatprep.subr.mxu0 0.0
    %1640 = vmatpush1.msra.mxu0 0.0
    %1641 = vmatprep.subr.mxu0 0.0
    %1642 = vmatpush1.msra.mxu0 0.0
    %1643 = vmatprep.subr.mxu0 0.0
    %1644 = vmatpush1.msra.mxu0 0.0
    %1645 = vmatprep.subr.mxu0 0.0
    %1646 = vmatpush1.msra.mxu0 0.0
    %1647 = vmatprep.subr.mxu0 0.0
    %1648 = vmatpush1.msra.mxu0 0.0
    %1649 = vmatprep.subr.mxu0 0.0
    %1650 = vmatpush1.msra.mxu0 0.0
    %1651 = vmatprep.subr.mxu0 0.0
    %1652 = vmatpush1.msra.mxu0 0.0
    %1653 = vmatprep.subr.mxu0 0.0
    %1654 = vmatpush1.msra.mxu0 0.0
    %1655 = vmatprep.subr.mxu0 0.0
    %1656 = vmatpush1.msra.mxu0 0.0
    %1657 = vmatprep.subr.mxu0 0.0
    %1658 = vmatpush1.msra.mxu0 0.0
    %1659 = vmatprep.subr.mxu0 0.0
    %1660 = vmatpush1.msra.mxu0 0.0
    %1661 = vmatprep.subr.mxu0 0.0
    %1662 = vmatpush1.msra.mxu0 0.0
    %1663 = vmatprep.subr.mxu0 0.0
    %1664 = vmatpush1.msra.mxu0 0.0
    %1665 = vmatprep.subr.mxu0 0.0
    %1666 = vmatpush1.msra.mxu0 0.0
    %1667 = vmatprep.subr.mxu0 0.0
    %1668 = vmatpush1.msra.mxu0 0.0
    %1669 = vmatprep.subr.mxu0 0.0
    %1670 = vmatpush1.msra.mxu0 0.0
    %1671 = vmatprep.subr.mxu0 0.0
    %1672 = vmatpush1.msra.mxu0 0.0
    %1673 = vmatprep.subr.mxu0 0.0
    %1674 = vmatpush1.msra.mxu0 0.0
    %1675 = vmatprep.subr.mxu0 0.0
    %1676 = vmatpush1.msra.mxu0 0.0
    %1677 = vmatprep.subr.mxu0 0.0
    %1678 = vmatpush1.msra.mxu0 0.0
    %1679 = vmatprep.subr.mxu0 0.0
    %1680 = vmatpush1.msra.mxu0 0.0
    %1681 = vmatprep.subr.mxu0 0.0
    %1682 = vmatpush1.msra.mxu0 0.0
    %1683 = vmatprep.subr.mxu0 0.0
    %1684 = vmatpush1.msra.mxu0 0.0
    %1685 = vmatprep.subr.mxu0 0.0
    %1686 = vmatpush1.msra.mxu0 0.0
    %1687 = vmatprep.subr.mxu0 0.0
    %1688 = vmatpush1.msra.mxu0 0.0
    %1689 = vmatprep.subr.mxu0 0.0
    %1690 = vmatpush1.msra.mxu0 0.0
    %1691 = vmatprep.subr.mxu0 0.0
    %1692 = vmatpush1.msra.mxu0 0.0
    %1693 = vmatprep.subr.mxu0 0.0
    %1694 = vmatpush1.msra.mxu0 0.0
    %1695 = vmatprep.subr.mxu0 0.0
    %1696 = vmatpush1.msra.mxu0 0.0
    %1697 = vmatprep.subr.mxu0 0.0
    %1698 = vmatpush1.msra.mxu0 0.0
    %1699 = vmatprep.mubr.f32.mxu0 0.0
    %v1700 = vand.u32 %v1552, 4294901760
    %1701 = vmatmul.mubr.f32.gmra.mrb[0].mxu0 %v1700
    %v1702 = vpop.f32.mrb[0].mxu0
    %v1703 = vadd.f32 %v1627, %v1702
    %v1704 = vpop.f32.mrb[0].mxu0
    %1705 = vdwg.mxu0
    %1706 = vmatprep.subr.mxu0 0.0
    %v1707 = vand.u32 %v1543, 4294901760
    %v1708 = vsub.f32 %v1543, %v1707
    %1709 = vmatpush1.msra.mxu0 %v1708
    %1710 = vmatprep.subr.mxu0 0.0
    %1711 = vmatpush1.msra.mxu0 0.0
    %1712 = vmatprep.subr.mxu0 0.0
    %1713 = vmatpush1.msra.mxu0 0.0
    %1714 = vmatprep.subr.mxu0 0.0
    %1715 = vmatpush1.msra.mxu0 0.0
    %1716 = vmatprep.subr.mxu0 0.0
    %1717 = vmatpush1.msra.mxu0 0.0
    %1718 = vmatprep.subr.mxu0 0.0
    %1719 = vmatpush1.msra.mxu0 0.0
    %1720 = vmatprep.subr.mxu0 0.0
    %1721 = vmatpush1.msra.mxu0 0.0
    %1722 = vmatprep.subr.mxu0 0.0
    %1723 = vmatpush1.msra.mxu0 0.0
    %1724 = vmatprep.subr.mxu0 0.0
    %1725 = vmatpush1.msra.mxu0 0.0
    %1726 = vmatprep.subr.mxu0 0.0
    %1727 = vmatpush1.msra.mxu0 0.0
    %1728 = vmatprep.subr.mxu0 0.0
    %1729 = vmatpush1.msra.mxu0 0.0
    %1730 = vmatprep.subr.mxu0 0.0
    %1731 = vmatpush1.msra.mxu0 0.0
    %1732 = vmatprep.subr.mxu0 0.0
    %1733 = vmatpush1.msra.mxu0 0.0
    %1734 = vmatprep.subr.mxu0 0.0
    %1735 = vmatpush1.msra.mxu0 0.0
    %1736 = vmatprep.subr.mxu0 0.0
    %1737 = vmatpush1.msra.mxu0 0.0
    %1738 = vmatprep.subr.mxu0 0.0
    %1739 = vmatpush1.msra.mxu0 0.0
    %1740 = vmatprep.subr.mxu0 0.0
    %1741 = vmatpush1.msra.mxu0 0.0
    %1742 = vmatprep.subr.mxu0 0.0
    %1743 = vmatpush1.msra.mxu0 0.0
    %1744 = vmatprep.subr.mxu0 0.0
    %1745 = vmatpush1.msra.mxu0 0.0
    %1746 = vmatprep.subr.mxu0 0.0
    %1747 = vmatpush1.msra.mxu0 0.0
    %1748 = vmatprep.subr.mxu0 0.0
    %1749 = vmatpush1.msra.mxu0 0.0
    %1750 = vmatprep.subr.mxu0 0.0
    %1751 = vmatpush1.msra.mxu0 0.0
    %1752 = vmatprep.subr.mxu0 0.0
    %1753 = vmatpush1.msra.mxu0 0.0
    %1754 = vmatprep.subr.mxu0 0.0
    %1755 = vmatpush1.msra.mxu0 0.0
    %1756 = vmatprep.subr.mxu0 0.0
    %1757 = vmatpush1.msra.mxu0 0.0
    %1758 = vmatprep.subr.mxu0 0.0
    %1759 = vmatpush1.msra.mxu0 0.0
    %1760 = vmatprep.subr.mxu0 0.0
    %1761 = vmatpush1.msra.mxu0 0.0
    %1762 = vmatprep.subr.mxu0 0.0
    %1763 = vmatpush1.msra.mxu0 0.0
    %1764 = vmatprep.subr.mxu0 0.0
    %1765 = vmatpush1.msra.mxu0 0.0
    %1766 = vmatprep.subr.mxu0 0.0
    %1767 = vmatpush1.msra.mxu0 0.0
    %1768 = vmatprep.subr.mxu0 0.0
    %1769 = vmatpush1.msra.mxu0 0.0
    %1770 = vmatprep.subr.mxu0 0.0
    %1771 = vmatpush1.msra.mxu0 0.0
    %1772 = vmatprep.mubr.f32.mxu0 0.0
    %v1773 = vand.u32 %v1552, 4294901760
    %v1774 = vsub.f32 %v1552, %v1773
    %1775 = vmatmul.mubr.f32.gmra.mrb[0].mxu0 %v1774
    %v1776 = vpop.f32.mrb[0].mxu0
    %v1777 = vadd.f32 %v1703, %v1776
    %v1778 = vpop.f32.mrb[0].mxu0
    %1779 = vdwg.mxu0
    %1780 = vmatprep.subr.mxu0 0.0
    %v1781 = vand.u32 %v1543, 4294901760
    %1782 = vmatpush1.msra.mxu0 %v1781
    %1783 = vmatprep.subr.mxu0 0.0
    %1784 = vmatpush1.msra.mxu0 0.0
    %1785 = vmatprep.subr.mxu0 0.0
    %1786 = vmatpush1.msra.mxu0 0.0
    %1787 = vmatprep.subr.mxu0 0.0
    %1788 = vmatpush1.msra.mxu0 0.0
    %1789 = vmatprep.subr.mxu0 0.0
    %1790 = vmatpush1.msra.mxu0 0.0
    %1791 = vmatprep.subr.mxu0 0.0
    %1792 = vmatpush1.msra.mxu0 0.0
    %1793 = vmatprep.subr.mxu0 0.0
    %1794 = vmatpush1.msra.mxu0 0.0
    %1795 = vmatprep.subr.mxu0 0.0
    %1796 = vmatpush1.msra.mxu0 0.0
    %1797 = vmatprep.subr.mxu0 0.0
    %1798 = vmatpush1.msra.mxu0 0.0
    %1799 = vmatprep.subr.mxu0 0.0
    %1800 = vmatpush1.msra.mxu0 0.0
    %1801 = vmatprep.subr.mxu0 0.0
    %1802 = vmatpush1.msra.mxu0 0.0
    %1803 = vmatprep.subr.mxu0 0.0
    %1804 = vmatpush1.msra.mxu0 0.0
    %1805 = vmatprep.subr.mxu0 0.0
    %1806 = vmatpush1.msra.mxu0 0.0
    %1807 = vmatprep.subr.mxu0 0.0
    %1808 = vmatpush1.msra.mxu0 0.0
    %1809 = vmatprep.subr.mxu0 0.0
    %1810 = vmatpush1.msra.mxu0 0.0
    %1811 = vmatprep.subr.mxu0 0.0
    %1812 = vmatpush1.msra.mxu0 0.0
    %1813 = vmatprep.subr.mxu0 0.0
    %1814 = vmatpush1.msra.mxu0 0.0
    %1815 = vmatprep.subr.mxu0 0.0
    %1816 = vmatpush1.msra.mxu0 0.0
    %1817 = vmatprep.subr.mxu0 0.0
    %1818 = vmatpush1.msra.mxu0 0.0
    %1819 = vmatprep.subr.mxu0 0.0
    %1820 = vmatpush1.msra.mxu0 0.0
    %1821 = vmatprep.subr.mxu0 0.0
    %1822 = vmatpush1.msra.mxu0 0.0
    %1823 = vmatprep.subr.mxu0 0.0
    %1824 = vmatpush1.msra.mxu0 0.0
    %1825 = vmatprep.subr.mxu0 0.0
    %1826 = vmatpush1.msra.mxu0 0.0
    %1827 = vmatprep.subr.mxu0 0.0
    %1828 = vmatpush1.msra.mxu0 0.0
    %1829 = vmatprep.subr.mxu0 0.0
    %1830 = vmatpush1.msra.mxu0 0.0
    %1831 = vmatprep.subr.mxu0 0.0
    %1832 = vmatpush1.msra.mxu0 0.0
    %1833 = vmatprep.subr.mxu0 0.0
    %1834 = vmatpush1.msra.mxu0 0.0
    %1835 = vmatprep.subr.mxu0 0.0
    %1836 = vmatpush1.msra.mxu0 0.0
    %1837 = vmatprep.subr.mxu0 0.0
    %1838 = vmatpush1.msra.mxu0 0.0
    %1839 = vmatprep.subr.mxu0 0.0
    %1840 = vmatpush1.msra.mxu0 0.0
    %1841 = vmatprep.subr.mxu0 0.0
    %1842 = vmatpush1.msra.mxu0 0.0
    %1843 = vmatprep.subr.mxu0 0.0
    %1844 = vmatpush1.msra.mxu0 0.0
    %1845 = vmatprep.mubr.f32.mxu0 0.0
    %v1846 = vand.u32 %v1552, 4294901760
    %v1847 = vsub.f32 %v1552, %v1846
    %v1848 = vand.u32 %v1847, 4294901760
    %1849 = vmatmul.mubr.f32.gmra.mrb[0].mxu0 %v1848
    %v1850 = vpop.f32.mrb[0].mxu0
    %v1851 = vadd.f32 %v1777, %v1850
    %v1852 = vpop.f32.mrb[0].mxu0
    %1853 = vdwg.mxu0
    %1854 = vmatprep.subr.mxu0 0.0
    %v1855 = vand.u32 %v1543, 4294901760
    %v1856 = vsub.f32 %v1543, %v1855
    %v1857 = vand.u32 %v1856, 4294901760
    %1858 = vmatpush1.msra.mxu0 %v1857
    %1859 = vmatprep.subr.mxu0 0.0
    %1860 = vmatpush1.msra.mxu0 0.0
    %1861 = vmatprep.subr.mxu0 0.0
    %1862 = vmatpush1.msra.mxu0 0.0
    %1863 = vmatprep.subr.mxu0 0.0
    %1864 = vmatpush1.msra.mxu0 0.0
    %1865 = vmatprep.subr.mxu0 0.0
    %1866 = vmatpush1.msra.mxu0 0.0
    %1867 = vmatprep.subr.mxu0 0.0
    %1868 = vmatpush1.msra.mxu0 0.0
    %1869 = vmatprep.subr.mxu0 0.0
    %1870 = vmatpush1.msra.mxu0 0.0
    %1871 = vmatprep.subr.mxu0 0.0
    %1872 = vmatpush1.msra.mxu0 0.0
    %1873 = vmatprep.subr.mxu0 0.0
    %1874 = vmatpush1.msra.mxu0 0.0
    %1875 = vmatprep.subr.mxu0 0.0
    %1876 = vmatpush1.msra.mxu0 0.0
    %1877 = vmatprep.subr.mxu0 0.0
    %1878 = vmatpush1.msra.mxu0 0.0
    %1879 = vmatprep.subr.mxu0 0.0
    %1880 = vmatpush1.msra.mxu0 0.0
    %1881 = vmatprep.subr.mxu0 0.0
    %1882 = vmatpush1.msra.mxu0 0.0
    %1883 = vmatprep.subr.mxu0 0.0
    %1884 = vmatpush1.msra.mxu0 0.0
    %1885 = vmatprep.subr.mxu0 0.0
    %1886 = vmatpush1.msra.mxu0 0.0
    %1887 = vmatprep.subr.mxu0 0.0
    %1888 = vmatpush1.msra.mxu0 0.0
    %1889 = vmatprep.subr.mxu0 0.0
    %1890 = vmatpush1.msra.mxu0 0.0
    %1891 = vmatprep.subr.mxu0 0.0
    %1892 = vmatpush1.msra.mxu0 0.0
    %1893 = vmatprep.subr.mxu0 0.0
    %1894 = vmatpush1.msra.mxu0 0.0
    %1895 = vmatprep.subr.mxu0 0.0
    %1896 = vmatpush1.msra.mxu0 0.0
    %1897 = vmatprep.subr.mxu0 0.0
    %1898 = vmatpush1.msra.mxu0 0.0
    %1899 = vmatprep.subr.mxu0 0.0
    %1900 = vmatpush1.msra.mxu0 0.0
    %1901 = vmatprep.subr.mxu0 0.0
    %1902 = vmatpush1.msra.mxu0 0.0
    %1903 = vmatprep.subr.mxu0 0.0
    %1904 = vmatpush1.msra.mxu0 0.0
    %1905 = vmatprep.subr.mxu0 0.0
    %1906 = vmatpush1.msra.mxu0 0.0
    %1907 = vmatprep.subr.mxu0 0.0
    %1908 = vmatpush1.msra.mxu0 0.0
    %1909 = vmatprep.subr.mxu0 0.0
    %1910 = vmatpush1.msra.mxu0 0.0
    %1911 = vmatprep.subr.mxu0 0.0
    %1912 = vmatpush1.msra.mxu0 0.0
    %1913 = vmatprep.subr.mxu0 0.0
    %1914 = vmatpush1.msra.mxu0 0.0
    %1915 = vmatprep.subr.mxu0 0.0
    %1916 = vmatpush1.msra.mxu0 0.0
    %1917 = vmatprep.subr.mxu0 0.0
    %1918 = vmatpush1.msra.mxu0 0.0
    %1919 = vmatprep.subr.mxu0 0.0
    %1920 = vmatpush1.msra.mxu0 0.0
    %1921 = vmatprep.mubr.f32.mxu0 0.0
    %v1922 = vand.u32 %v1552, 4294901760
    %1923 = vmatmul.mubr.f32.gmra.mrb[0].mxu0 %v1922
    %v1924 = vpop.f32.mrb[0].mxu0
    %v1925 = vadd.f32 %v1851, %v1924
    %v1926 = vpop.f32.mrb[0].mxu0
    %1927 = vdwg.mxu0
    %1928 = vmatprep.subr.mxu0 0.0
    %v1929 = vand.u32 %v1543, 4294901760
    %1930 = vmatpush1.msra.mxu0 %v1929
    %1931 = vmatprep.subr.mxu0 0.0
    %1932 = vmatpush1.msra.mxu0 0.0
    %1933 = vmatprep.subr.mxu0 0.0
    %1934 = vmatpush1.msra.mxu0 0.0
    %1935 = vmatprep.subr.mxu0 0.0
    %1936 = vmatpush1.msra.mxu0 0.0
    %1937 = vmatprep.subr.mxu0 0.0
    %1938 = vmatpush1.msra.mxu0 0.0
    %1939 = vmatprep.subr.mxu0 0.0
    %1940 = vmatpush1.msra.mxu0 0.0
    %1941 = vmatprep.subr.mxu0 0.0
    %1942 = vmatpush1.msra.mxu0 0.0
    %1943 = vmatprep.subr.mxu0 0.0
    %1944 = vmatpush1.msra.mxu0 0.0
    %1945 = vmatprep.subr.mxu0 0.0
    %1946 = vmatpush1.msra.mxu0 0.0
    %1947 = vmatprep.subr.mxu0 0.0
    %1948 = vmatpush1.msra.mxu0 0.0
    %1949 = vmatprep.subr.mxu0 0.0
    %1950 = vmatpush1.msra.mxu0 0.0
    %1951 = vmatprep.subr.mxu0 0.0
    %1952 = vmatpush1.msra.mxu0 0.0
    %1953 = vmatprep.subr.mxu0 0.0
    %1954 = vmatpush1.msra.mxu0 0.0
    %1955 = vmatprep.subr.mxu0 0.0
    %1956 = vmatpush1.msra.mxu0 0.0
    %1957 = vmatprep.subr.mxu0 0.0
    %1958 = vmatpush1.msra.mxu0 0.0
    %1959 = vmatprep.subr.mxu0 0.0
    %1960 = vmatpush1.msra.mxu0 0.0
    %1961 = vmatprep.subr.mxu0 0.0
    %1962 = vmatpush1.msra.mxu0 0.0
    %1963 = vmatprep.subr.mxu0 0.0
    %1964 = vmatpush1.msra.mxu0 0.0
    %1965 = vmatprep.subr.mxu0 0.0
    %1966 = vmatpush1.msra.mxu0 0.0
    %1967 = vmatprep.subr.mxu0 0.0
    %1968 = vmatpush1.msra.mxu0 0.0
    %1969 = vmatprep.subr.mxu0 0.0
    %1970 = vmatpush1.msra.mxu0 0.0
    %1971 = vmatprep.subr.mxu0 0.0
    %1972 = vmatpush1.msra.mxu0 0.0
    %1973 = vmatprep.subr.mxu0 0.0
    %1974 = vmatpush1.msra.mxu0 0.0
    %1975 = vmatprep.subr.mxu0 0.0
    %1976 = vmatpush1.msra.mxu0 0.0
    %1977 = vmatprep.subr.mxu0 0.0
    %1978 = vmatpush1.msra.mxu0 0.0
    %1979 = vmatprep.subr.mxu0 0.0
    %1980 = vmatpush1.msra.mxu0 0.0
    %1981 = vmatprep.subr.mxu0 0.0
    %1982 = vmatpush1.msra.mxu0 0.0
    %1983 = vmatprep.subr.mxu0 0.0
    %1984 = vmatpush1.msra.mxu0 0.0
    %1985 = vmatprep.subr.mxu0 0.0
    %1986 = vmatpush1.msra.mxu0 0.0
    %1987 = vmatprep.subr.mxu0 0.0
    %1988 = vmatpush1.msra.mxu0 0.0
    %1989 = vmatprep.subr.mxu0 0.0
    %1990 = vmatpush1.msra.mxu0 0.0
    %1991 = vmatprep.subr.mxu0 0.0
    %1992 = vmatpush1.msra.mxu0 0.0
    %1993 = vmatprep.mubr.f32.mxu0 0.0
    %v1994 = vand.u32 %v1552, 4294901760
    %1995 = vmatmul.mubr.f32.gmra.mrb[0].mxu0 %v1994
    %v1996 = vpop.f32.mrb[0].mxu0
    %v1997 = vadd.f32 %v1925, %v1996
    %v1998 = vpop.f32.mrb[0].mxu0
    %1999 = vdwg.mxu0
    %v2001 = vrot.slane %v1997, 1
    %v2003 = vmax.f32 %v1997, %v2001
    %v2005 = vrot.slane %v2003, 2
    %v2007 = vmax.f32 %v2003, %v2005
    %v2008 = vlaneseq
    %v2009 = vshrl.u32 %v2008, 7
    %v2010 = vsub.s32 0, %v2009
    %v2011 = vrot.slane %v2007, %v2010
    %v2012 = vsub.f32 %v1997, %v2011
    %v2013 = vmul.f32 %v2012, 1.442695
    %v2014 = vpow.pop %v2013
    %v2016 = vrot.slane %v2014, 1
    %v2018 = vadd.f32 %v2014, %v2016
    %v2019 = vrot.slane %v2014, 2
    %v2021 = vadd.f32 %v2018, %v2019
    %v2022 = vrot.slane %v2014, 3
    %v2024 = vadd.f32 %v2021, %v2022
    %v2025 = vrcp.pop %v2024
    %v2026 = vmul.f32 1.0, %v2025
    %v2027 = vlaneseq
    %v2028 = vshrl.u32 %v2027, 7
    %v2029 = vsub.s32 0, %v2028
    %v2030 = vrot.slane %v2026, %v2029
    %v2031 = vmul.f32 %v2014, %v2030
    %vm2032 = vcmask 60416
    %2033 = vst.msk [vmem:[#allocation2] sm:$0xf] %vm2032, %v2031
    // Predicated region
    $region38: #{_policy_forward.1} parent=1 // pred_check
      _
    $region39: #{_policy_forward.1} parent=1 // pred_check_branch
      %2035 = sbr.rel (0) target = $region41
    $region40: #{_policy_forward.1} parent=1 // pred_region
      %s2037 = ssub.s32 64, 64
      %2038 = vsyncadd [#allocation3], %s2037
      %s2040 = sshll.u32 [#allocation2], 4
      %s2041 = int_to_ptr.vmem [resolvable:$true] %s2040
      %2043 = dma.vmem_to_hbm [thread:$0]  %s2041, 64, %s9, [#allocation3]
    $region41: #{_policy_forward.1} parent=1 // pred_fallthru
      _
    // Predicated region
    $region42: #{_policy_forward.1} parent=1 // pred_check
      _
    $region43: #{_policy_forward.1} parent=1 // pred_check_branch
      %2045 = sbr.rel (0) target = $region45
    $region44: #{_policy_forward.1} parent=1 // pred_region
      %2046 = dma.done [#allocation3], 64
    $region45: #{_policy_forward.1} parent=1 // pred_fallthru
      _
    %2047 = vsyncpa [#allocation3], 1

</llo_original>
